<compile_context>
chip_gen: v7x
topology: tpu7x:2x2x1
jax: 0.10.0
libtpu: 0.0.40
codegen_flags: <defaults>
</compile_context>

<pallas_src>
import numpy as np
import jax
import jax.numpy as jnp
from jax.experimental import pallas as pl
from jax.experimental.pallas import tpu as pltpu  # noqa: F401

# ---------------- problem sizes (small, consistent with the module) ----------
B, N, M = 2, 16, 8          # batch, x tokens, latent tokens
DIM = 32                    # model dim
HEAD_DIM = 8
NUM_HEADS = 4
INNER = HEAD_DIM * NUM_HEADS
PARTIAL_ROTARY_FACTOR = 1
ROT_DIM = int(HEAD_DIM * PARTIAL_ROTARY_FACTOR)
ROPE_BASE = 10000.0
LN_EPS = 1e-5
SCALE = HEAD_DIM ** (-0.5)
NEG_INF = -1e9

BN = B * N                  # x rows in the slab
BM = B * M                  # latent rows in the slab
BTOT = BN + BM              # total slab rows


# ---------------- rotary tables (pure setup glue) -----------------------------
def _rope_tables(seq_len: int):
    # Standard "rotate-half" RoPE tables: cos/sin of shape (seq_len, ROT_DIM)
    inv_freq = 1.0 / (ROPE_BASE ** (jnp.arange(0, ROT_DIM, 2, dtype=jnp.float32) / ROT_DIM))
    pos = jnp.arange(seq_len, dtype=jnp.float32)
    angles = pos[:, None] * inv_freq[None, :]              # (seq, ROT_DIM/2)
    emb = jnp.concatenate([angles, angles], axis=-1)       # (seq, ROT_DIM)
    return jnp.cos(emb), jnp.sin(emb)


def _neg_half_matrix():
    # Signed permutation P with (k @ P) == neg_half(k) applied per head block:
    #   out[:, 8h+j] = -k[:, 8h+j+half]   for j <  half
    #   out[:, 8h+j] = +k[:, 8h+j-half]   for half <= j < ROT_DIM
    # Columns for pass-through dims (j >= ROT_DIM) are zero (they get sin=0).
    half = ROT_DIM // 2
    P = np.zeros((INNER, INNER), dtype=np.float32)
    for h in range(NUM_HEADS):
        base = h * HEAD_DIM
        for j in range(half):
            P[base + j + half, base + j] = -1.0
        for j in range(half, ROT_DIM):
            P[base + j - half, base + j] = 1.0
    return jnp.asarray(P)


# ---------------- Pallas kernel ------------------------------------------------
def _perceiver_attention_kernel(slab_ref, g_ref, bta_ref, cos_ref, sin_ref, mask_ref,
                                wall_ref, wo_ref, o_ref):
    # --- one fused LayerNorm over the whole token slab (x rows + latent rows)
    slab = slab_ref[...]                                    # (BTOT, DIM) f32
    mu = jnp.mean(slab, axis=-1, keepdims=True)
    var = jnp.mean(jnp.square(slab - mu), axis=-1, keepdims=True)
    norm = (slab - mu) * jax.lax.rsqrt(var + LN_EPS) * g_ref[...] + bta_ref[...]

    # --- single fused projection: [q*scale | k | v | rope-partner(k)] = 128 lanes
    proj = jnp.dot(norm.astype(jnp.bfloat16), wall_ref[...],
                   preferred_element_type=jnp.float32)      # (BTOT, 4*INNER) f32

    q = proj[BN:, 0 * INNER:1 * INNER]                      # (BM, INNER)   latent rows only
    k = proj[:, 1 * INNER:2 * INNER]                        # (BTOT, INNER)
    v = proj[:, 2 * INNER:3 * INNER]                        # (BTOT, INNER)
    kp = proj[:, 3 * INNER:4 * INNER]                       # rotate-half partner (sign in weights)

    # --- RoPE on keys; latent rows have cos=1 / sin=0 so it is a no-op there
    k = k * cos_ref[...] + kp * sin_ref[...]

    # --- split into heads only now (tiny relayouts), cast MXU operands to bf16
    q3 = jnp.transpose(q.reshape(BM, NUM_HEADS, HEAD_DIM), (1, 0, 2)).astype(jnp.bfloat16)
    k3 = jnp.transpose(k.reshape(BTOT, NUM_HEADS, HEAD_DIM), (1, 0, 2)).astype(jnp.bfloat16)
    v3 = jnp.transpose(v.reshape(BTOT, NUM_HEADS, HEAD_DIM), (1, 0, 2)).astype(jnp.bfloat16)

    # --- attention for all heads at once; additive mask kills cross-batch pairs
    sim = jnp.einsum('hqd,hkd->hqk', q3, k3,
                     preferred_element_type=jnp.float32)    # (H, BM, BTOT) f32
    sim = sim + mask_ref[...][None]
    sim = sim - jnp.max(sim, axis=-1, keepdims=True)
    p = jnp.exp(sim)
    attn = p * pl.reciprocal(jnp.sum(p, axis=-1, keepdims=True), approx=True)

    out3 = jnp.einsum('hqk,hkd->hqd', attn.astype(jnp.bfloat16), v3,
                      preferred_element_type=jnp.float32)   # (H, BM, D) f32

    # --- output projection fused with head merge: plain 2-D matmul
    out = jnp.transpose(out3, (1, 0, 2)).reshape(BM, INNER).astype(jnp.bfloat16)
    o_ref[...] = jnp.dot(out, wo_ref[...], preferred_element_type=jnp.float32)   # (BM, DIM)


# ---------------- wrapper ------------------------------------------------------
def perceiver_attention(x, latents, params):
    b, n, _ = x.shape
    _, m, _ = latents.shape
    bn, bm = b * n, b * m

    # token slab: x rows first, then latent rows
    slab = jnp.concatenate([x.reshape(bn, DIM), latents.reshape(bm, DIM)], axis=0)

    # per-row LayerNorm affine tables (gx/bx for x rows, gl/bl for latent rows)
    g_rows = jnp.concatenate([jnp.tile(params["gx"][None, :], (bn, 1)),
                              jnp.tile(params["gl"][None, :], (bm, 1))], axis=0)
    b_rows = jnp.concatenate([jnp.tile(params["bx"][None, :], (bn, 1)),
                              jnp.tile(params["bl"][None, :], (bm, 1))], axis=0)

    # rotary tables, laid out per lane over all heads; identity rows for latents
    cos_t, sin_t = _rope_tables(n)                          # (n, ROT_DIM)
    if ROT_DIM < HEAD_DIM:
        cos_head = jnp.concatenate(
            [cos_t, jnp.ones((n, HEAD_DIM - ROT_DIM), jnp.float32)], axis=-1)
        sin_head = jnp.concatenate(
            [sin_t, jnp.zeros((n, HEAD_DIM - ROT_DIM), jnp.float32)], axis=-1)
    else:
        cos_head, sin_head = cos_t, sin_t
    cos_x = jnp.tile(cos_head, (b, NUM_HEADS))              # (bn, INNER)
    sin_x = jnp.tile(sin_head, (b, NUM_HEADS))
    cos_ext = jnp.concatenate([cos_x, jnp.ones((bm, INNER), jnp.float32)], axis=0)
    sin_ext = jnp.concatenate([sin_x, jnp.zeros((bm, INNER), jnp.float32)], axis=0)

    # additive mask keeping each latent query inside its own batch's keys
    q_batch = jnp.arange(bm) // m
    k_batch = jnp.concatenate([jnp.arange(bn) // n, jnp.arange(bm) // m])
    mask = jnp.where(q_batch[:, None] == k_batch[None, :], 0.0, NEG_INF).astype(jnp.float32)

    # fused weight slab: [wq*scale | wk | wv | wk @ P]  ->  (DIM, 128), bf16
    wq_t = (params["wq"] * SCALE).T                         # (DIM, INNER)
    wk_t = params["wkv"][:INNER].T                          # (DIM, INNER)
    wv_t = params["wkv"][INNER:].T                          # (DIM, INNER)
    wkp_t = wk_t @ _neg_half_matrix()                       # rotate-half folded into weights
    w_all = jnp.concatenate([wq_t, wk_t, wv_t, wkp_t], axis=1).astype(jnp.bfloat16)
    wo_t = params["wo"].T.astype(jnp.bfloat16)              # (INNER, DIM)

    out_flat = pl.pallas_call(
        _perceiver_attention_kernel,
        out_shape=jax.ShapeDtypeStruct((bm, DIM), jnp.float32),
    )(slab, g_rows, b_rows, cos_ext, sin_ext, mask, w_all, wo_t)

    return out_flat.reshape(b, m, DIM)


# ---------------- pure-JAX reference (for a sanity check) ----------------------
def _reference(x, latents, params):
    def ln(t, g, b):
        mu = jnp.mean(t, axis=-1, keepdims=True)
        var = jnp.mean(jnp.square(t - mu), axis=-1, keepdims=True)
        return (t - mu) / jnp.sqrt(var + LN_EPS) * g + b

    xn = ln(x, params["gx"], params["bx"])
    ln_ = ln(latents, params["gl"], params["bl"])

    q = ln_ @ params["wq"].T                     # (B, M, INNER)
    kv_x = xn @ params["wkv"].T                  # (B, N, 2*INNER)
    kv_l = ln_ @ params["wkv"].T                 # (B, M, 2*INNER)
    k_x, v_x = kv_x[..., :INNER], kv_x[..., INNER:]
    k_l, v_l = kv_l[..., :INNER], kv_l[..., INNER:]

    def to_heads(t):
        bb, s, _ = t.shape
        return t.reshape(bb, s, NUM_HEADS, HEAD_DIM).transpose(0, 2, 1, 3)  # (B, H, S, D)

    q, k_x, v_x = to_heads(q), to_heads(k_x), to_heads(v_x)
    k_l, v_l = to_heads(k_l), to_heads(v_l)

    cos, sin = _rope_tables(x.shape[1])
    k_rope, k_pass = k_x[..., :ROT_DIM], k_x[..., ROT_DIM:]
    half = ROT_DIM // 2
    neg_half = jnp.concatenate([-k_rope[..., half:], k_rope[..., :half]], axis=-1)
    k_rope = k_rope * cos + neg_half * sin
    k_x = jnp.concatenate([k_rope, k_pass], axis=-1)

    k = jnp.concatenate([k_x, k_l], axis=2)      # (B, H, N+M, D)
    v = jnp.concatenate([v_x, v_l], axis=2)
    qs = q * SCALE
    sim = jnp.einsum('bhid,bhjd->bhij', qs, k)
    sim = sim - jnp.max(sim, axis=-1, keepdims=True)
    attn = jax.nn.softmax(sim, axis=-1)
    out = jnp.einsum('bhij,bhjd->bhid', attn, v)                 # (B, H, M, D)
    out = out.transpose(0, 2, 1, 3).reshape(x.shape[0], M, INNER)
    return out @ params["wo"].T


# ---------------- main ----------------------------------------------------------
if __name__ == "__main__":
    key = jax.random.PRNGKey(0)
    keys = jax.random.split(key, 9)

    x = jax.random.normal(keys[0], (B, N, DIM), dtype=jnp.float32)
    latents = jax.random.normal(keys[1], (B, M, DIM), dtype=jnp.float32)

    params = {
        "gx": 1.0 + 0.1 * jax.random.normal(keys[2], (DIM,), dtype=jnp.float32),
        "bx": 0.1 * jax.random.normal(keys[3], (DIM,), dtype=jnp.float32),
        "gl": 1.0 + 0.1 * jax.random.normal(keys[4], (DIM,), dtype=jnp.float32),
        "bl": 0.1 * jax.random.normal(keys[5], (DIM,), dtype=jnp.float32),
        "wq": 0.05 * jax.random.normal(keys[6], (INNER, DIM), dtype=jnp.float32),
        "wkv": 0.05 * jax.random.normal(keys[7], (2 * INNER, DIM), dtype=jnp.float32),
        "wo": 0.05 * jax.random.normal(keys[8], (DIM, INNER), dtype=jnp.float32),
    }

    out = perceiver_attention(x, latents, params)
    out = jax.block_until_ready(out)

    ref = jax.block_until_ready(_reference(x, latents, params))
    assert out.shape == (B, M, DIM)
    assert jnp.allclose(out, ref, atol=2e-2, rtol=2e-2), "mismatch vs JAX reference"

    print("KERNEL_OK")
</pallas_src>

<mosaic_0001>
module attributes {stable_mosaic.version = 11 : i64} {
  func.func @_perceiver_attention_kernel(%arg0: memref<48x32xf32, #tpu.memory_space<vmem>>, %arg1: memref<48x32xf32, #tpu.memory_space<vmem>>, %arg2: memref<48x32xf32, #tpu.memory_space<vmem>>, %arg3: memref<48x32xf32, #tpu.memory_space<vmem>>, %arg4: memref<48x32xf32, #tpu.memory_space<vmem>>, %arg5: memref<16x48xf32, #tpu.memory_space<vmem>>, %arg6: memref<32x128xbf16, #tpu.memory_space<vmem>>, %arg7: memref<32x32xbf16, #tpu.memory_space<vmem>>, %arg8: memref<16x32xf32, #tpu.memory_space<vmem>>) attributes {dimension_semantics = [], scalar_prefetch = 0 : i64, scratch_operands = 0 : i64, tpu.core_type = #tpu.core_type<tc>} {
    %c0 = arith.constant 0 : index
    %c0_0 = arith.constant 0 : index
    %0 = vector.load %arg0[%c0, %c0_0] : memref<48x32xf32, #tpu.memory_space<vmem>>, vector<48x32xf32>
    %cst = arith.constant dense<0.000000e+00> : vector<48xf32>
    %1 = vector.multi_reduction <add>, %0, %cst [1] : vector<48x32xf32> to vector<48xf32>
    %2 = vector.shape_cast %1 : vector<48xf32> to vector<48x1xf32>
    %cst_1 = arith.constant 3.200000e+01 : f32
    %3 = vector.broadcast %cst_1 : f32 to vector<48x1xf32>
    %4 = arith.divf %2, %3 : vector<48x1xf32>
    %5 = vector.broadcast %4 : vector<48x1xf32> to vector<48x32xf32>
    %6 = arith.subf %0, %5 : vector<48x32xf32>
    %7 = arith.mulf %6, %6 : vector<48x32xf32>
    %cst_2 = arith.constant dense<0.000000e+00> : vector<48xf32>
    %8 = vector.multi_reduction <add>, %7, %cst_2 [1] : vector<48x32xf32> to vector<48xf32>
    %9 = vector.shape_cast %8 : vector<48xf32> to vector<48x1xf32>
    %cst_3 = arith.constant 3.200000e+01 : f32
    %10 = vector.broadcast %cst_3 : f32 to vector<48x1xf32>
    %11 = arith.divf %9, %10 : vector<48x1xf32>
    %12 = vector.broadcast %4 : vector<48x1xf32> to vector<48x32xf32>
    %13 = arith.subf %0, %12 : vector<48x32xf32>
    %cst_4 = arith.constant 9.99999974E-6 : f32
    %14 = vector.broadcast %cst_4 : f32 to vector<48x1xf32>
    %15 = arith.addf %11, %14 : vector<48x1xf32>
    %16 = math.rsqrt %15 : vector<48x1xf32>
    %17 = vector.broadcast %16 : vector<48x1xf32> to vector<48x32xf32>
    %18 = arith.mulf %13, %17 : vector<48x32xf32>
    %c0_5 = arith.constant 0 : index
    %c0_6 = arith.constant 0 : index
    %19 = vector.load %arg1[%c0_5, %c0_6] : memref<48x32xf32, #tpu.memory_space<vmem>>, vector<48x32xf32>
    %20 = arith.mulf %18, %19 : vector<48x32xf32>
    %c0_7 = arith.constant 0 : index
    %c0_8 = arith.constant 0 : index
    %21 = vector.load %arg2[%c0_7, %c0_8] : memref<48x32xf32, #tpu.memory_space<vmem>>, vector<48x32xf32>
    %22 = arith.addf %20, %21 : vector<48x32xf32>
    %23 = arith.truncf %22 : vector<48x32xf32> to vector<48x32xbf16>
    %c0_9 = arith.constant 0 : index
    %c0_10 = arith.constant 0 : index
    %24 = vector.load %arg6[%c0_9, %c0_10] : memref<32x128xbf16, #tpu.memory_space<vmem>>, vector<32x128xbf16>
    %cst_11 = arith.constant dense<0.000000e+00> : vector<48x128xf32>
    %25 = tpu.matmul %23, %24, %cst_11 {dimension_numbers = #tpu.dot_dimension_numbers<[1], [0], [0], [1], [0, 0, 1, 1], [], []>} : vector<48x32xbf16>, vector<32x128xbf16>, vector<48x128xf32> -> vector<48x128xf32>
    %26 = vector.extract_strided_slice %25 {offsets = [32, 0], sizes = [16, 32], strides = [1, 1]} : vector<48x128xf32> to vector<16x32xf32>
    %27 = vector.extract_strided_slice %25 {offsets = [0, 32], sizes = [48, 32], strides = [1, 1]} : vector<48x128xf32> to vector<48x32xf32>
    %28 = vector.extract_strided_slice %25 {offsets = [0, 64], sizes = [48, 32], strides = [1, 1]} : vector<48x128xf32> to vector<48x32xf32>
    %29 = vector.extract_strided_slice %25 {offsets = [0, 96], sizes = [48, 32], strides = [1, 1]} : vector<48x128xf32> to vector<48x32xf32>
    %c0_12 = arith.constant 0 : index
    %c0_13 = arith.constant 0 : index
    %30 = vector.load %arg3[%c0_12, %c0_13] : memref<48x32xf32, #tpu.memory_space<vmem>>, vector<48x32xf32>
    %31 = arith.mulf %27, %30 : vector<48x32xf32>
    %c0_14 = arith.constant 0 : index
    %c0_15 = arith.constant 0 : index
    %32 = vector.load %arg4[%c0_14, %c0_15] : memref<48x32xf32, #tpu.memory_space<vmem>>, vector<48x32xf32>
    %33 = arith.mulf %29, %32 : vector<48x32xf32>
    %34 = arith.addf %31, %33 : vector<48x32xf32>
    %35 = vector.shape_cast %26 : vector<16x32xf32> to vector<16x4x8xf32>
    %36 = tpu.transpose %35, [1, 0, 2] : vector<16x4x8xf32> -> vector<4x16x8xf32>
    %37 = arith.truncf %36 : vector<4x16x8xf32> to vector<4x16x8xbf16>
    %38 = vector.shape_cast %34 : vector<48x32xf32> to vector<48x4x8xf32>
    %39 = tpu.transpose %38, [1, 0, 2] : vector<48x4x8xf32> -> vector<4x48x8xf32>
    %40 = arith.truncf %39 : vector<4x48x8xf32> to vector<4x48x8xbf16>
    %41 = vector.shape_cast %28 : vector<48x32xf32> to vector<48x4x8xf32>
    %42 = tpu.transpose %41, [1, 0, 2] : vector<48x4x8xf32> -> vector<4x48x8xf32>
    %43 = arith.truncf %42 : vector<4x48x8xf32> to vector<4x48x8xbf16>
    "tpu.trace_start"() <{level = 10 : i32, message = "hqd,hkd->hqk"}> : () -> ()
    %cst_16 = arith.constant dense<0.000000e+00> : vector<4x16x48xf32>
    %44 = tpu.matmul %37, %40, %cst_16 {dimension_numbers = #tpu.dot_dimension_numbers<[2], [2], [1], [1], [0, 0, 0, 1, 1, 1], [0], [0]>} : vector<4x16x8xbf16>, vector<4x48x8xbf16>, vector<4x16x48xf32> -> vector<4x16x48xf32>
    "tpu.trace_stop"() : () -> ()
    %c0_17 = arith.constant 0 : index
    %c0_18 = arith.constant 0 : index
    %45 = vector.load %arg5[%c0_17, %c0_18] : memref<16x48xf32, #tpu.memory_space<vmem>>, vector<16x48xf32>
    %46 = vector.shape_cast %45 : vector<16x48xf32> to vector<1x16x48xf32>
    %47 = vector.broadcast %46 : vector<1x16x48xf32> to vector<4x16x48xf32>
    %48 = arith.addf %44, %47 : vector<4x16x48xf32>
    %cst_19 = arith.constant dense<0xFF800000> : vector<4x16xf32>
    %49 = vector.multi_reduction <maximumf>, %48, %cst_19 [2] : vector<4x16x48xf32> to vector<4x16xf32>
    %50 = vector.shape_cast %49 : vector<4x16xf32> to vector<4x16x1xf32>
    %51 = vector.broadcast %50 : vector<4x16x1xf32> to vector<4x16x48xf32>
    %52 = arith.subf %48, %51 : vector<4x16x48xf32>
    %53 = math.exp %52 : vector<4x16x48xf32>
    %cst_20 = arith.constant dense<0.000000e+00> : vector<4x16xf32>
    %54 = vector.multi_reduction <add>, %53, %cst_20 [2] : vector<4x16x48xf32> to vector<4x16xf32>
    %55 = vector.shape_cast %54 : vector<4x16xf32> to vector<4x16x1xf32>
    %56 = tpu.reciprocal %55 {approx = true} : vector<4x16x1xf32> -> vector<4x16x1xf32>
    %57 = vector.broadcast %56 : vector<4x16x1xf32> to vector<4x16x48xf32>
    %58 = arith.mulf %53, %57 : vector<4x16x48xf32>
    %59 = arith.truncf %58 : vector<4x16x48xf32> to vector<4x16x48xbf16>
    "tpu.trace_start"() <{level = 10 : i32, message = "hqk,hkd->hqd"}> : () -> ()
    %cst_21 = arith.constant dense<0.000000e+00> : vector<4x16x8xf32>
    %60 = tpu.matmul %59, %43, %cst_21 {dimension_numbers = #tpu.dot_dimension_numbers<[2], [1], [1], [2], [0, 0, 0, 1, 1, 2], [0], [0]>} : vector<4x16x48xbf16>, vector<4x48x8xbf16>, vector<4x16x8xf32> -> vector<4x16x8xf32>
    "tpu.trace_stop"() : () -> ()
    %61 = tpu.transpose %60, [1, 0, 2] : vector<4x16x8xf32> -> vector<16x4x8xf32>
    %62 = vector.shape_cast %61 : vector<16x4x8xf32> to vector<16x32xf32>
    %63 = arith.truncf %62 : vector<16x32xf32> to vector<16x32xbf16>
    %c0_22 = arith.constant 0 : index
    %c0_23 = arith.constant 0 : index
    %64 = vector.load %arg7[%c0_22, %c0_23] : memref<32x32xbf16, #tpu.memory_space<vmem>>, vector<32x32xbf16>
    %cst_24 = arith.constant dense<0.000000e+00> : vector<16x32xf32>
    %65 = tpu.matmul %63, %64, %cst_24 {dimension_numbers = #tpu.dot_dimension_numbers<[1], [0], [0], [1], [0, 0, 1, 1], [], []>} : vector<16x32xbf16>, vector<32x32xbf16>, vector<16x32xf32> -> vector<16x32xf32>
    %c0_25 = arith.constant 0 : index
    %c0_26 = arith.constant 0 : index
    %66 = vector.load %arg8[%c0_25, %c0_26] : memref<16x32xf32, #tpu.memory_space<vmem>>, vector<16x32xf32>
    tpu.vector_store %arg8[%c0_25, %c0_26], %65 {strides = array<i32>} : memref<16x32xf32, #tpu.memory_space<vmem>>, vector<16x32xf32>,
    return
  }
}

</mosaic_0001>

<llo_original>
// kernel: tpu_custom_call.1
$region0: #{tpu_custom_call.1}
  #allocation0 [shape = 'u32[]', space=smem, size = 0x4, offset = 0x4, fixed_abs, tag = 'smem constant byte address 0x4 - core index']
  #allocation1 [shape = 'u32[144,128]{1,0:T(1,128)}', space=vmem, size = 0x12000, scoped, tag = 'internal scratch']
  %s0 = inlined_call_operand.vmem [shape: f32[48,32], index: 0, kind: input, shape index: {}]
  %s1 = inlined_call_operand.vmem [shape: f32[48,32], index: 1, kind: input, shape index: {}]
  %s2 = inlined_call_operand.vmem [shape: f32[48,32], index: 2, kind: input, shape index: {}]
  %s3 = inlined_call_operand.vmem [shape: f32[48,32], index: 3, kind: input, shape index: {}]
  %s4 = inlined_call_operand.vmem [shape: f32[48,32], index: 4, kind: input, shape index: {}]
  %s5 = inlined_call_operand.vmem [shape: f32[16,48], index: 5, kind: input, shape index: {}]
  %s6 = inlined_call_operand.vmem [shape: bf16[32,128], index: 6, kind: input, shape index: {}]
  %s7 = inlined_call_operand.vmem [shape: bf16[32,32], index: 7, kind: input, shape index: {}]
  %s8 = inlined_call_operand.hbm [shape: f32[16,32], index: 8, kind: output, shape index: {}]
  %s9 = sld [smem:[#allocation0]]
  $region42: #{tpu_custom_call.1} parent=0
    _
  %s11 = ssub.s32 1, %s9
  %s12 = scalar_select 0, %s11, %s9
  $region1: #{tpu_custom_call.1} parent=0
    #allocation2 [shape = 'u8[8192]{0}', space=vmem, size = 0x2000, scoped, tag = 'output window, operand 0, single buffered']
    #allocation3 [shape = 's32[1]{0}', space=sflag, size = 0x4, scoped, tag = 'scoped memory for tpu_custom_call.1']
    %13 = vsyncpa [#allocation3], 0
    // Predicated region
    $region2: #{tpu_custom_call.1} parent=1 // pred_check
      _
    $region3: #{tpu_custom_call.1} parent=1 // pred_check_branch
      %15 = sbr.rel (0) target = $region5
    $region4: #{tpu_custom_call.1} parent=1 // pred_region
      _
    $region5: #{tpu_custom_call.1} parent=1 // pred_fallthru
      _
    // Predicated region
    $region6: #{tpu_custom_call.1} parent=1 // pred_check
      _
    $region7: #{tpu_custom_call.1} parent=1 // pred_check_branch
      %17 = sbr.rel (0) target = $region9
    $region8: #{tpu_custom_call.1} parent=1 // pred_region
      _
    $region9: #{tpu_custom_call.1} parent=1 // pred_fallthru
      _
    // Predicated region
    $region10: #{tpu_custom_call.1} parent=1 // pred_check
      _
    $region11: #{tpu_custom_call.1} parent=1 // pred_check_branch
      %19 = sbr.rel (0) target = $region13
    $region12: #{tpu_custom_call.1} parent=1 // pred_region
      _
    $region13: #{tpu_custom_call.1} parent=1 // pred_fallthru
      _
    // Predicated region
    $region14: #{tpu_custom_call.1} parent=1 // pred_check
      _
    $region15: #{tpu_custom_call.1} parent=1 // pred_check_branch
      %21 = sbr.rel (0) target = $region17
    $region16: #{tpu_custom_call.1} parent=1 // pred_region
      _
    $region17: #{tpu_custom_call.1} parent=1 // pred_fallthru
      _
    // Predicated region
    $region18: #{tpu_custom_call.1} parent=1 // pred_check
      _
    $region19: #{tpu_custom_call.1} parent=1 // pred_check_branch
      %23 = sbr.rel (0) target = $region21
    $region20: #{tpu_custom_call.1} parent=1 // pred_region
      _
    $region21: #{tpu_custom_call.1} parent=1 // pred_fallthru
      _
    // Predicated region
    $region22: #{tpu_custom_call.1} parent=1 // pred_check
      _
    $region23: #{tpu_custom_call.1} parent=1 // pred_check_branch
      %25 = sbr.rel (0) target = $region25
    $region24: #{tpu_custom_call.1} parent=1 // pred_region
      _
    $region25: #{tpu_custom_call.1} parent=1 // pred_fallthru
      _
    // Predicated region
    $region26: #{tpu_custom_call.1} parent=1 // pred_check
      _
    $region27: #{tpu_custom_call.1} parent=1 // pred_check_branch
      %27 = sbr.rel (0) target = $region29
    $region28: #{tpu_custom_call.1} parent=1 // pred_region
      _
    $region29: #{tpu_custom_call.1} parent=1 // pred_fallthru
      _
    // Predicated region
    $region30: #{tpu_custom_call.1} parent=1 // pred_check
      _
    $region31: #{tpu_custom_call.1} parent=1 // pred_check_branch
      %29 = sbr.rel (0) target = $region33
    $region32: #{tpu_custom_call.1} parent=1 // pred_region
      _
    $region33: #{tpu_custom_call.1} parent=1 // pred_fallthru
      _
    %v31 = vld [vmem:[%s0] sm:$0xff]
    %v32 = vld [vmem:[%s0 + $0x8] sm:$0xff]
    %v33 = vld [vmem:[%s0 + $0x10] sm:$0xff]
    %v34 = vld [vmem:[%s0 + $0x18] sm:$0xff]
    %v35 = vld [vmem:[%s0 + $0x20] sm:$0xff]
    %v36 = vld [vmem:[%s0 + $0x28] sm:$0xff]
    %vm37 = vcmask 261120
    %v38 = vsel %vm37, %v31, 0.0
    %39 = vadd.xlane.f32.xlu0 %v38
    %v40 = vpop.xlane.xlu0 %39
    %v41 = vsel %vm37, %v32, 0.0
    %42 = vadd.xlane.f32.xlu0 %v41
    %v43 = vpop.xlane.xlu0 %42
    %v44 = vsel %vm37, %v33, 0.0
    %45 = vadd.xlane.f32.xlu0 %v44
    %v46 = vpop.xlane.xlu0 %45
    %v47 = vsel %vm37, %v34, 0.0
    %48 = vadd.xlane.f32.xlu0 %v47
    %v49 = vpop.xlane.xlu0 %48
    %v50 = vsel %vm37, %v35, 0.0
    %51 = vadd.xlane.f32.xlu0 %v50
    %v52 = vpop.xlane.xlu0 %51
    %v53 = vsel %vm37, %v36, 0.0
    %54 = vadd.xlane.f32.xlu0 %v53
    %v55 = vpop.xlane.xlu0 %54
    %v56 = vrcp.pop 32.0
    %v57 = vmul.f32 %v40, %v56
    %v58 = vmul.f32 %v43, %v56
    %v59 = vmul.f32 %v46, %v56
    %v60 = vmul.f32 %v49, %v56
    %v61 = vmul.f32 %v52, %v56
    %v62 = vmul.f32 %v55, %v56
    %v63 = vsub.f32 %v31, %v57
    %v64 = vsub.f32 %v32, %v58
    %v65 = vsub.f32 %v33, %v59
    %v66 = vsub.f32 %v34, %v60
    %v67 = vsub.f32 %v35, %v61
    %v68 = vsub.f32 %v36, %v62
    %v69 = vmul.f32 %v63, %v63
    %v70 = vmul.f32 %v64, %v64
    %v71 = vmul.f32 %v65, %v65
    %v72 = vmul.f32 %v66, %v66
    %v73 = vmul.f32 %v67, %v67
    %v74 = vmul.f32 %v68, %v68
    %v75 = vsel %vm37, %v69, 0.0
    %76 = vadd.xlane.f32.xlu0 %v75
    %v77 = vpop.xlane.xlu0 %76
    %v78 = vsel %vm37, %v70, 0.0
    %79 = vadd.xlane.f32.xlu0 %v78
    %v80 = vpop.xlane.xlu0 %79
    %v81 = vsel %vm37, %v71, 0.0
    %82 = vadd.xlane.f32.xlu0 %v81
    %v83 = vpop.xlane.xlu0 %82
    %v84 = vsel %vm37, %v72, 0.0
    %85 = vadd.xlane.f32.xlu0 %v84
    %v86 = vpop.xlane.xlu0 %85
    %v87 = vsel %vm37, %v73, 0.0
    %88 = vadd.xlane.f32.xlu0 %v87
    %v89 = vpop.xlane.xlu0 %88
    %v90 = vsel %vm37, %v74, 0.0
    %91 = vadd.xlane.f32.xlu0 %v90
    %v92 = vpop.xlane.xlu0 %91
    %v93 = vmul.f32 %v77, %v56
    %v94 = vmul.f32 %v80, %v56
    %v95 = vmul.f32 %v83, %v56
    %v96 = vmul.f32 %v86, %v56
    %v97 = vmul.f32 %v89, %v56
    %v98 = vmul.f32 %v92, %v56
    %v99 = vadd.f32 %v93, 1e-05
    %v100 = vadd.f32 %v94, 1e-05
    %v101 = vadd.f32 %v95, 1e-05
    %v102 = vadd.f32 %v96, 1e-05
    %v103 = vadd.f32 %v97, 1e-05
    %v104 = vadd.f32 %v98, 1e-05
    %v105 = vrsqrt.pop %v99
    %v106 = vrsqrt.pop %v100
    %v107 = vrsqrt.pop %v101
    %v108 = vrsqrt.pop %v102
    %v109 = vrsqrt.pop %v103
    %v110 = vrsqrt.pop %v104
    %v111 = vmul.f32 %v63, %v105
    %v112 = vmul.f32 %v64, %v106
    %v113 = vmul.f32 %v65, %v107
    %v114 = vmul.f32 %v66, %v108
    %v115 = vmul.f32 %v67, %v109
    %v116 = vmul.f32 %v68, %v110
    %v117 = vld [vmem:[%s1] sm:$0xff]
    %v118 = vld [vmem:[%s1 + $0x8] sm:$0xff]
    %v119 = vld [vmem:[%s1 + $0x10] sm:$0xff]
    %v120 = vld [vmem:[%s1 + $0x18] sm:$0xff]
    %v121 = vld [vmem:[%s1 + $0x20] sm:$0xff]
    %v122 = vld [vmem:[%s1 + $0x28] sm:$0xff]
    %v123 = vmul.f32 %v111, %v117
    %v124 = vmul.f32 %v112, %v118
    %v125 = vmul.f32 %v113, %v119
    %v126 = vmul.f32 %v114, %v120
    %v127 = vmul.f32 %v115, %v121
    %v128 = vmul.f32 %v116, %v122
    %v129 = vld [vmem:[%s2] sm:$0xff]
    %v130 = vld [vmem:[%s2 + $0x8] sm:$0xff]
    %v131 = vld [vmem:[%s2 + $0x10] sm:$0xff]
    %v132 = vld [vmem:[%s2 + $0x18] sm:$0xff]
    %v133 = vld [vmem:[%s2 + $0x20] sm:$0xff]
    %v134 = vld [vmem:[%s2 + $0x28] sm:$0xff]
    %v135 = vadd.f32 %v123, %v129
    %v136 = vadd.f32 %v124, %v130
    %v137 = vadd.f32 %v125, %v131
    %v138 = vadd.f32 %v126, %v132
    %v139 = vadd.f32 %v127, %v133
    %v140 = vadd.f32 %v128, %v134
    %v141 = vpack.c.bf16 %v136, %v135
    %v142 = vpack.c.bf16 %v138, %v137
    %v143 = vpack.c.bf16 %v140, %v139
    %v144 = vld [vmem:[%s6] sm:$0xf]
    %v145 = vld [vmem:[%s6 + $0x4] sm:$0xf]
    %v146 = vld [vmem:[%s6 + $0x8] sm:$0xf]
    %v147 = vld [vmem:[%s6 + $0xc] sm:$0xf]
    %v152 = vunpack.c.l.b16 %v144
    %v153 = vunpack.c.l.b16 %v145
    %v154 = vunpack.c.l.b16 %v146
    %v155 = vunpack.c.l.b16 %v147
    %v156 = vpack.c.b16 %v153, %v152
    %v157 = vpack.c.b16 %v155, %v154
    %v161 = vsel %vm37, %v141, 0
    %v164 = vsel %vm37, %v142, 0
    %v167 = vsel %vm37, %v143, 0
    %169 = vmatprep.subr.bf16.mxu0 0
    %170 = vmatpush1.bf16.msra.mxu0 %v156
    %171 = vmatprep.subr.bf16.mxu0 0
    %172 = vmatpush1.bf16.msra.mxu0 %v157
    %173 = vmatprep.subr.bf16.mxu0 0
    %174 = vmatpush1.bf16.msra.mxu0 0
    %175 = vmatprep.subr.bf16.mxu0 0
    %176 = vmatpush1.bf16.msra.mxu0 0
    %177 = vmatprep.subr.bf16.mxu0 0
    %178 = vmatpush1.bf16.msra.mxu0 0
    %179 = vmatprep.subr.bf16.mxu0 0
    %180 = vmatpush1.bf16.msra.mxu0 0
    %181 = vmatprep.subr.bf16.mxu0 0
    %182 = vmatpush1.bf16.msra.mxu0 0
    %183 = vmatprep.subr.bf16.mxu0 0
    %184 = vmatpush1.bf16.msra.mxu0 0
    %185 = vmatprep.subr.bf16.mxu0 0
    %186 = vmatpush1.bf16.msra.mxu0 0
    %187 = vmatprep.subr.bf16.mxu0 0
    %188 = vmatpush1.bf16.msra.mxu0 0
    %189 = vmatprep.subr.bf16.mxu0 0
    %190 = vmatpush1.bf16.msra.mxu0 0
    %191 = vmatprep.subr.bf16.mxu0 0
    %192 = vmatpush1.bf16.msra.mxu0 0
    %193 = vmatprep.subr.bf16.mxu0 0
    %194 = vmatpush1.bf16.msra.mxu0 0
    %195 = vmatprep.subr.bf16.mxu0 0
    %196 = vmatpush1.bf16.msra.mxu0 0
    %197 = vmatprep.subr.bf16.mxu0 0
    %198 = vmatpush1.bf16.msra.mxu0 0
    %199 = vmatprep.subr.bf16.mxu0 0
    %200 = vmatpush1.bf16.msra.mxu0 0
    %201 = vmatprep.mubr.bf16.mxu0 0
    %202 = vmatmul.mubr.bf16.gmra.mrb[0].mxu0 %v161
    %v203 = vpop.f32.mrb[0].mxu0
    %v204 = vadd.f32 0.0, %v203
    %v205 = vpop.f32.mrb[0].mxu0
    %v206 = vpop.f32.mrb[0].mxu0
    %v207 = vadd.f32 0.0, %v206
    %v208 = vpop.f32.mrb[0].mxu0
    %209 = vmatprep.mubr.bf16.mxu0 0
    %210 = vmatmul.mubr.bf16.gmra.mrb[0].mxu0 %v164
    %v211 = vpop.f32.mrb[0].mxu0
    %v212 = vadd.f32 0.0, %v211
    %v213 = vpop.f32.mrb[0].mxu0
    %v214 = vpop.f32.mrb[0].mxu0
    %v215 = vadd.f32 0.0, %v214
    %v216 = vpop.f32.mrb[0].mxu0
    %217 = vmatprep.mubr.bf16.mxu0 0
    %218 = vmatmul.mubr.bf16.gmra.mrb[0].mxu0 %v167
    %v219 = vpop.f32.mrb[0].mxu0
    %v220 = vadd.f32 0.0, %v219
    %v221 = vpop.f32.mrb[0].mxu0
    %v222 = vpop.f32.mrb[0].mxu0
    %v223 = vadd.f32 0.0, %v222
    %v224 = vpop.f32.mrb[0].mxu0
    %225 = vdwg.mxu0
    %v226 = vld [vmem:[%s3] sm:$0xff]
    %v227 = vld [vmem:[%s3 + $0x8] sm:$0xff]
    %v228 = vld [vmem:[%s3 + $0x10] sm:$0xff]
    %v229 = vld [vmem:[%s3 + $0x18] sm:$0xff]
    %v230 = vld [vmem:[%s3 + $0x20] sm:$0xff]
    %v231 = vld [vmem:[%s3 + $0x28] sm:$0xff]
    %238 = vrot.lane.b32.xlu0 %v226, 32
    %v239 = vpop.permute.xlu0 %238
    %240 = vrot.lane.b32.xlu0 %v227, 32
    %v241 = vpop.permute.xlu0 %240
    %242 = vrot.lane.b32.xlu0 %v228, 32
    %v243 = vpop.permute.xlu0 %242
    %244 = vrot.lane.b32.xlu0 %v229, 32
    %v245 = vpop.permute.xlu0 %244
    %246 = vrot.lane.b32.xlu0 %v230, 32
    %v247 = vpop.permute.xlu0 %246
    %248 = vrot.lane.b32.xlu0 %v231, 32
    %v249 = vpop.permute.xlu0 %248
    %v256 = vmul.f32 %v204, %v239
    %v257 = vmul.f32 %v207, %v241
    %v258 = vmul.f32 %v212, %v243
    %v259 = vmul.f32 %v215, %v245
    %v260 = vmul.f32 %v220, %v247
    %v261 = vmul.f32 %v223, %v249
    %v262 = vld [vmem:[%s4] sm:$0xff]
    %v263 = vld [vmem:[%s4 + $0x8] sm:$0xff]
    %v264 = vld [vmem:[%s4 + $0x10] sm:$0xff]
    %v265 = vld [vmem:[%s4 + $0x18] sm:$0xff]
    %v266 = vld [vmem:[%s4 + $0x20] sm:$0xff]
    %v267 = vld [vmem:[%s4 + $0x28] sm:$0xff]
    %274 = vrot.lane.b32.xlu0 %v262, 96
    %v275 = vpop.permute.xlu0 %274
    %276 = vrot.lane.b32.xlu0 %v263, 96
    %v277 = vpop.permute.xlu0 %276
    %278 = vrot.lane.b32.xlu0 %v264, 96
    %v279 = vpop.permute.xlu0 %278
    %280 = vrot.lane.b32.xlu0 %v265, 96
    %v281 = vpop.permute.xlu0 %280
    %282 = vrot.lane.b32.xlu0 %v266, 96
    %v283 = vpop.permute.xlu0 %282
    %284 = vrot.lane.b32.xlu0 %v267, 96
    %v285 = vpop.permute.xlu0 %284
    %v292 = vmul.f32 %v204, %v275
    %v293 = vmul.f32 %v207, %v277
    %v294 = vmul.f32 %v212, %v279
    %v295 = vmul.f32 %v215, %v281
    %v296 = vmul.f32 %v220, %v283
    %v297 = vmul.f32 %v223, %v285
    %304 = vrot.lane.b32.xlu0 %v292, 64
    %v305 = vpop.permute.xlu0 %304
    %306 = vrot.lane.b32.xlu0 %v293, 64
    %v307 = vpop.permute.xlu0 %306
    %308 = vrot.lane.b32.xlu0 %v294, 64
    %v309 = vpop.permute.xlu0 %308
    %310 = vrot.lane.b32.xlu0 %v295, 64
    %v311 = vpop.permute.xlu0 %310
    %312 = vrot.lane.b32.xlu0 %v296, 64
    %v313 = vpop.permute.xlu0 %312
    %314 = vrot.lane.b32.xlu0 %v297, 64
    %v315 = vpop.permute.xlu0 %314
    %v322 = vadd.f32 %v256, %v305
    %v323 = vadd.f32 %v257, %v307
    %v324 = vadd.f32 %v258, %v309
    %v325 = vadd.f32 %v259, %v311
    %v326 = vadd.f32 %v260, %v313
    %v327 = vadd.f32 %v261, %v315
    %330 = vrot.lane.b32.xlu0 %v220, 120
    %v331 = vpop.permute.xlu0 %330
    %332 = vrot.lane.b32.xlu0 %v223, 120
    %v333 = vpop.permute.xlu0 %332
    %336 = vrot.lane.b32.xlu0 %v220, 112
    %v337 = vpop.permute.xlu0 %336
    %338 = vrot.lane.b32.xlu0 %v223, 112
    %v339 = vpop.permute.xlu0 %338
    %342 = vrot.lane.b32.xlu0 %v220, 104
    %v343 = vpop.permute.xlu0 %342
    %344 = vrot.lane.b32.xlu0 %v223, 104
    %v345 = vpop.permute.xlu0 %344
    %v348 = vcombine.low %v220, %v337
    %v349 = vcombine.high %v220, %v337
    %v351 = vunpack.c.l.s4 1983009808
    %v352 = vunpack.c.0.s8 %v351
    %v353 = vlaneseq
    %v354 = vshrl.u32 %v353, 7
    %v355 = vsub.s32 %v352, %v354
    %v356 = vrot.slane %v348, %v355
    %v358 = vunpack.c.l.s4 1983009808
    %v359 = vunpack.c.0.s8 %v358
    %v360 = vlaneseq
    %v361 = vshrl.u32 %v360, 7
    %v362 = vsub.s32 %v359, %v361
    %v363 = vrot.slane %v349, %v362
    %v364 = vcombine.low %v331, %v343
    %v365 = vcombine.high %v331, %v343
    %v367 = vunpack.c.l.s4 1983009808
    %v368 = vunpack.c.0.s8 %v367
    %v369 = vlaneseq
    %v370 = vshrl.u32 %v369, 7
    %v371 = vsub.s32 %v368, %v370
    %v372 = vrot.slane %v364, %v371
    %v374 = vunpack.c.l.s4 1983009808
    %v375 = vunpack.c.0.s8 %v374
    %v376 = vlaneseq
    %v377 = vshrl.u32 %v376, 7
    %v378 = vsub.s32 %v375, %v377
    %v379 = vrot.slane %v365, %v378
    %v380 = vcombine.low %v356, %v372
    %v381 = vcombine.high %v356, %v372
    %v383 = vunpack.c.l.s4 1934713408
    %v384 = vunpack.c.0.s8 %v383
    %v385 = vlaneseq
    %v386 = vshrl.u32 %v385, 7
    %v387 = vsub.s32 %v384, %v386
    %v388 = vrot.slane %v380, %v387
    %v390 = vunpack.c.l.s4 1934713408
    %v391 = vunpack.c.0.s8 %v390
    %v392 = vlaneseq
    %v393 = vshrl.u32 %v392, 7
    %v394 = vsub.s32 %v391, %v393
    %v395 = vrot.slane %v381, %v394
    %v396 = vcombine.low %v363, %v379
    %v397 = vcombine.high %v363, %v379
    %v399 = vunpack.c.l.s4 1934713408
    %v400 = vunpack.c.0.s8 %v399
    %v401 = vlaneseq
    %v402 = vshrl.u32 %v401, 7
    %v403 = vsub.s32 %v400, %v402
    %v404 = vrot.slane %v396, %v403
    %v406 = vunpack.c.l.s4 1934713408
    %v407 = vunpack.c.0.s8 %v406
    %v408 = vlaneseq
    %v409 = vshrl.u32 %v408, 7
    %v410 = vsub.s32 %v407, %v409
    %v411 = vrot.slane %v397, %v410
    %v412 = vcombine.high %v388, 0.0
    %v413 = vcombine.high %v395, 0.0
    %v414 = vcombine.high %v404, 0.0
    %v415 = vcombine.high %v411, 0.0
    %v416 = vcombine.low %v223, %v339
    %v417 = vcombine.high %v223, %v339
    %v419 = vunpack.c.l.s4 1983009808
    %v420 = vunpack.c.0.s8 %v419
    %v421 = vlaneseq
    %v422 = vshrl.u32 %v421, 7
    %v423 = vsub.s32 %v420, %v422
    %v424 = vrot.slane %v416, %v423
    %v426 = vunpack.c.l.s4 1983009808
    %v427 = vunpack.c.0.s8 %v426
    %v428 = vlaneseq
    %v429 = vshrl.u32 %v428, 7
    %v430 = vsub.s32 %v427, %v429
    %v431 = vrot.slane %v417, %v430
    %v432 = vcombine.low %v333, %v345
    %v433 = vcombine.high %v333, %v345
    %v435 = vunpack.c.l.s4 1983009808
    %v436 = vunpack.c.0.s8 %v435
    %v437 = vlaneseq
    %v438 = vshrl.u32 %v437, 7
    %v439 = vsub.s32 %v436, %v438
    %v440 = vrot.slane %v432, %v439
    %v442 = vunpack.c.l.s4 1983009808
    %v443 = vunpack.c.0.s8 %v442
    %v444 = vlaneseq
    %v445 = vshrl.u32 %v444, 7
    %v446 = vsub.s32 %v443, %v445
    %v447 = vrot.slane %v433, %v446
    %v448 = vcombine.low %v424, %v440
    %v449 = vcombine.high %v424, %v440
    %v451 = vunpack.c.l.s4 1934713408
    %v452 = vunpack.c.0.s8 %v451
    %v453 = vlaneseq
    %v454 = vshrl.u32 %v453, 7
    %v455 = vsub.s32 %v452, %v454
    %v456 = vrot.slane %v448, %v455
    %v458 = vunpack.c.l.s4 1934713408
    %v459 = vunpack.c.0.s8 %v458
    %v460 = vlaneseq
    %v461 = vshrl.u32 %v460, 7
    %v462 = vsub.s32 %v459, %v461
    %v463 = vrot.slane %v449, %v462
    %v464 = vcombine.low %v431, %v447
    %v465 = vcombine.high %v431, %v447
    %v467 = vunpack.c.l.s4 1934713408
    %v468 = vunpack.c.0.s8 %v467
    %v469 = vlaneseq
    %v470 = vshrl.u32 %v469, 7
    %v471 = vsub.s32 %v468, %v470
    %v472 = vrot.slane %v464, %v471
    %v474 = vunpack.c.l.s4 1934713408
    %v475 = vunpack.c.0.s8 %v474
    %v476 = vlaneseq
    %v477 = vshrl.u32 %v476, 7
    %v478 = vsub.s32 %v475, %v477
    %v479 = vrot.slane %v465, %v478
    %v480 = vcombine.high %v456, 0.0
    %v481 = vcombine.high %v463, 0.0
    %v482 = vcombine.high %v472, 0.0
    %v483 = vcombine.high %v479, 0.0
    %v484 = vcombine.low %v388, %v395
    %v486 = vunpack.c.l.s4 1983009808
    %v487 = vunpack.c.0.s8 %v486
    %v488 = vlaneseq
    %v489 = vshrl.u32 %v488, 7
    %v490 = vsub.s32 %v487, %v489
    %v491 = vrot.slane %v484, %v490
    %v492 = vcombine.low %v412, %v413
    %v494 = vunpack.c.l.s4 1983009808
    %v495 = vunpack.c.0.s8 %v494
    %v496 = vlaneseq
    %v497 = vshrl.u32 %v496, 7
    %v498 = vsub.s32 %v495, %v497
    %v499 = vrot.slane %v492, %v498
    %v500 = vcombine.low %v404, %v411
    %v502 = vunpack.c.l.s4 1983009808
    %v503 = vunpack.c.0.s8 %v502
    %v504 = vlaneseq
    %v505 = vshrl.u32 %v504, 7
    %v506 = vsub.s32 %v503, %v505
    %v507 = vrot.slane %v500, %v506
    %v508 = vcombine.low %v414, %v415
    %v510 = vunpack.c.l.s4 1983009808
    %v511 = vunpack.c.0.s8 %v510
    %v512 = vlaneseq
    %v513 = vshrl.u32 %v512, 7
    %v514 = vsub.s32 %v511, %v513
    %v515 = vrot.slane %v508, %v514
    %v516 = vcombine.low %v491, %v499
    %v517 = vcombine.high %v491, %v499
    %v519 = vunpack.c.l.s4 1934713408
    %v520 = vunpack.c.0.s8 %v519
    %v521 = vlaneseq
    %v522 = vshrl.u32 %v521, 7
    %v523 = vsub.s32 %v520, %v522
    %v524 = vrot.slane %v516, %v523
    %v526 = vunpack.c.l.s4 1934713408
    %v527 = vunpack.c.0.s8 %v526
    %v528 = vlaneseq
    %v529 = vshrl.u32 %v528, 7
    %v530 = vsub.s32 %v527, %v529
    %v531 = vrot.slane %v517, %v530
    %v532 = vcombine.low %v507, %v515
    %v533 = vcombine.high %v507, %v515
    %v535 = vunpack.c.l.s4 1934713408
    %v536 = vunpack.c.0.s8 %v535
    %v537 = vlaneseq
    %v538 = vshrl.u32 %v537, 7
    %v539 = vsub.s32 %v536, %v538
    %v540 = vrot.slane %v532, %v539
    %v542 = vunpack.c.l.s4 1934713408
    %v543 = vunpack.c.0.s8 %v542
    %v544 = vlaneseq
    %v545 = vshrl.u32 %v544, 7
    %v546 = vsub.s32 %v543, %v545
    %v547 = vrot.slane %v533, %v546
    %v548 = vcombine.low %v524, %v540
    %v549 = vcombine.high %v524, %v540
    %v550 = vcombine.low %v531, %v547
    %v551 = vcombine.high %v531, %v547
    %v552 = vcombine.low %v456, %v463
    %v554 = vunpack.c.l.s4 1983009808
    %v555 = vunpack.c.0.s8 %v554
    %v556 = vlaneseq
    %v557 = vshrl.u32 %v556, 7
    %v558 = vsub.s32 %v555, %v557
    %v559 = vrot.slane %v552, %v558
    %v560 = vcombine.low %v480, %v481
    %v562 = vunpack.c.l.s4 1983009808
    %v563 = vunpack.c.0.s8 %v562
    %v564 = vlaneseq
    %v565 = vshrl.u32 %v564, 7
    %v566 = vsub.s32 %v563, %v565
    %v567 = vrot.slane %v560, %v566
    %v568 = vcombine.low %v472, %v479
    %v570 = vunpack.c.l.s4 1983009808
    %v571 = vunpack.c.0.s8 %v570
    %v572 = vlaneseq
    %v573 = vshrl.u32 %v572, 7
    %v574 = vsub.s32 %v571, %v573
    %v575 = vrot.slane %v568, %v574
    %v576 = vcombine.low %v482, %v483
    %v578 = vunpack.c.l.s4 1983009808
    %v579 = vunpack.c.0.s8 %v578
    %v580 = vlaneseq
    %v581 = vshrl.u32 %v580, 7
    %v582 = vsub.s32 %v579, %v581
    %v583 = vrot.slane %v576, %v582
    %v584 = vcombine.low %v559, %v567
    %v585 = vcombine.high %v559, %v567
    %v587 = vunpack.c.l.s4 1934713408
    %v588 = vunpack.c.0.s8 %v587
    %v589 = vlaneseq
    %v590 = vshrl.u32 %v589, 7
    %v591 = vsub.s32 %v588, %v590
    %v592 = vrot.slane %v584, %v591
    %v594 = vunpack.c.l.s4 1934713408
    %v595 = vunpack.c.0.s8 %v594
    %v596 = vlaneseq
    %v597 = vshrl.u32 %v596, 7
    %v598 = vsub.s32 %v595, %v597
    %v599 = vrot.slane %v585, %v598
    %v600 = vcombine.low %v575, %v583
    %v601 = vcombine.high %v575, %v583
    %v603 = vunpack.c.l.s4 1934713408
    %v604 = vunpack.c.0.s8 %v603
    %v605 = vlaneseq
    %v606 = vshrl.u32 %v605, 7
    %v607 = vsub.s32 %v604, %v606
    %v608 = vrot.slane %v600, %v607
    %v610 = vunpack.c.l.s4 1934713408
    %v611 = vunpack.c.0.s8 %v610
    %v612 = vlaneseq
    %v613 = vshrl.u32 %v612, 7
    %v614 = vsub.s32 %v611, %v613
    %v615 = vrot.slane %v601, %v614
    %v616 = vcombine.low %v592, %v608
    %v617 = vcombine.high %v592, %v608
    %v618 = vcombine.low %v599, %v615
    %v619 = vcombine.high %v599, %v615
    %v620 = vpack.c.bf16 %v616, %v548
    %v621 = vpack.c.bf16 %v617, %v549
    %v622 = vpack.c.bf16 %v618, %v550
    %v623 = vpack.c.bf16 %v619, %v551
    %630 = vrot.lane.b32.xlu0 %v322, 120
    %v631 = vpop.permute.xlu0 %630
    %632 = vrot.lane.b32.xlu0 %v323, 120
    %v633 = vpop.permute.xlu0 %632
    %634 = vrot.lane.b32.xlu0 %v324, 120
    %v635 = vpop.permute.xlu0 %634
    %636 = vrot.lane.b32.xlu0 %v325, 120
    %v637 = vpop.permute.xlu0 %636
    %638 = vrot.lane.b32.xlu0 %v326, 120
    %v639 = vpop.permute.xlu0 %638
    %640 = vrot.lane.b32.xlu0 %v327, 120
    %v641 = vpop.permute.xlu0 %640
    %642 = vrot.lane.b32.xlu0 %v322, 112
    %v643 = vpop.permute.xlu0 %642
    %644 = vrot.lane.b32.xlu0 %v323, 112
    %v645 = vpop.permute.xlu0 %644
    %646 = vrot.lane.b32.xlu0 %v324, 112
    %v647 = vpop.permute.xlu0 %646
    %648 = vrot.lane.b32.xlu0 %v325, 112
    %v649 = vpop.permute.xlu0 %648
    %650 = vrot.lane.b32.xlu0 %v326, 112
    %v651 = vpop.permute.xlu0 %650
    %652 = vrot.lane.b32.xlu0 %v327, 112
    %v653 = vpop.permute.xlu0 %652
    %654 = vrot.lane.b32.xlu0 %v322, 104
    %v655 = vpop.permute.xlu0 %654
    %656 = vrot.lane.b32.xlu0 %v323, 104
    %v657 = vpop.permute.xlu0 %656
    %658 = vrot.lane.b32.xlu0 %v324, 104
    %v659 = vpop.permute.xlu0 %658
    %660 = vrot.lane.b32.xlu0 %v325, 104
    %v661 = vpop.permute.xlu0 %660
    %662 = vrot.lane.b32.xlu0 %v326, 104
    %v663 = vpop.permute.xlu0 %662
    %664 = vrot.lane.b32.xlu0 %v327, 104
    %v665 = vpop.permute.xlu0 %664
    %666 = vrot.lane.b32.xlu0 %v322, 96
    %v667 = vpop.permute.xlu0 %666
    %668 = vrot.lane.b32.xlu0 %v323, 96
    %v669 = vpop.permute.xlu0 %668
    %670 = vrot.lane.b32.xlu0 %v324, 96
    %v671 = vpop.permute.xlu0 %670
    %672 = vrot.lane.b32.xlu0 %v325, 96
    %v673 = vpop.permute.xlu0 %672
    %674 = vrot.lane.b32.xlu0 %v326, 96
    %v675 = vpop.permute.xlu0 %674
    %676 = vrot.lane.b32.xlu0 %v327, 96
    %v677 = vpop.permute.xlu0 %676
    %678 = vrot.lane.b32.xlu0 %v631, 96
    %v679 = vpop.permute.xlu0 %678
    %680 = vrot.lane.b32.xlu0 %v633, 96
    %v681 = vpop.permute.xlu0 %680
    %682 = vrot.lane.b32.xlu0 %v635, 96
    %v683 = vpop.permute.xlu0 %682
    %684 = vrot.lane.b32.xlu0 %v637, 96
    %v685 = vpop.permute.xlu0 %684
    %686 = vrot.lane.b32.xlu0 %v639, 96
    %v687 = vpop.permute.xlu0 %686
    %688 = vrot.lane.b32.xlu0 %v641, 96
    %v689 = vpop.permute.xlu0 %688
    %690 = vrot.lane.b32.xlu0 %v643, 96
    %v691 = vpop.permute.xlu0 %690
    %692 = vrot.lane.b32.xlu0 %v645, 96
    %v693 = vpop.permute.xlu0 %692
    %694 = vrot.lane.b32.xlu0 %v647, 96
    %v695 = vpop.permute.xlu0 %694
    %696 = vrot.lane.b32.xlu0 %v649, 96
    %v697 = vpop.permute.xlu0 %696
    %698 = vrot.lane.b32.xlu0 %v651, 96
    %v699 = vpop.permute.xlu0 %698
    %700 = vrot.lane.b32.xlu0 %v653, 96
    %v701 = vpop.permute.xlu0 %700
    %702 = vrot.lane.b32.xlu0 %v655, 96
    %v703 = vpop.permute.xlu0 %702
    %704 = vrot.lane.b32.xlu0 %v657, 96
    %v705 = vpop.permute.xlu0 %704
    %706 = vrot.lane.b32.xlu0 %v659, 96
    %v707 = vpop.permute.xlu0 %706
    %708 = vrot.lane.b32.xlu0 %v661, 96
    %v709 = vpop.permute.xlu0 %708
    %710 = vrot.lane.b32.xlu0 %v663, 96
    %v711 = vpop.permute.xlu0 %710
    %712 = vrot.lane.b32.xlu0 %v665, 96
    %v713 = vpop.permute.xlu0 %712
    %v738 = vcombine.low %v667, %v691
    %v739 = vcombine.high %v667, %v691
    %v741 = vunpack.c.l.s4 1983009808
    %v742 = vunpack.c.0.s8 %v741
    %v743 = vlaneseq
    %v744 = vshrl.u32 %v743, 7
    %v745 = vsub.s32 %v742, %v744
    %v746 = vrot.slane %v738, %v745
    %v748 = vunpack.c.l.s4 1983009808
    %v749 = vunpack.c.0.s8 %v748
    %v750 = vlaneseq
    %v751 = vshrl.u32 %v750, 7
    %v752 = vsub.s32 %v749, %v751
    %v753 = vrot.slane %v739, %v752
    %v754 = vcombine.low %v679, %v703
    %v755 = vcombine.high %v679, %v703
    %v757 = vunpack.c.l.s4 1983009808
    %v758 = vunpack.c.0.s8 %v757
    %v759 = vlaneseq
    %v760 = vshrl.u32 %v759, 7
    %v761 = vsub.s32 %v758, %v760
    %v762 = vrot.slane %v754, %v761
    %v764 = vunpack.c.l.s4 1983009808
    %v765 = vunpack.c.0.s8 %v764
    %v766 = vlaneseq
    %v767 = vshrl.u32 %v766, 7
    %v768 = vsub.s32 %v765, %v767
    %v769 = vrot.slane %v755, %v768
    %v770 = vcombine.low %v746, %v762
    %v771 = vcombine.high %v746, %v762
    %v773 = vunpack.c.l.s4 1934713408
    %v774 = vunpack.c.0.s8 %v773
    %v775 = vlaneseq
    %v776 = vshrl.u32 %v775, 7
    %v777 = vsub.s32 %v774, %v776
    %v778 = vrot.slane %v770, %v777
    %v780 = vunpack.c.l.s4 1934713408
    %v781 = vunpack.c.0.s8 %v780
    %v782 = vlaneseq
    %v783 = vshrl.u32 %v782, 7
    %v784 = vsub.s32 %v781, %v783
    %v785 = vrot.slane %v771, %v784
    %v786 = vcombine.low %v753, %v769
    %v787 = vcombine.high %v753, %v769
    %v789 = vunpack.c.l.s4 1934713408
    %v790 = vunpack.c.0.s8 %v789
    %v791 = vlaneseq
    %v792 = vshrl.u32 %v791, 7
    %v793 = vsub.s32 %v790, %v792
    %v794 = vrot.slane %v786, %v793
    %v796 = vunpack.c.l.s4 1934713408
    %v797 = vunpack.c.0.s8 %v796
    %v798 = vlaneseq
    %v799 = vshrl.u32 %v798, 7
    %v800 = vsub.s32 %v797, %v799
    %v801 = vrot.slane %v787, %v800
    %v802 = vcombine.high %v778, 0.0
    %v803 = vcombine.high %v785, 0.0
    %v804 = vcombine.high %v794, 0.0
    %v805 = vcombine.high %v801, 0.0
    %v806 = vcombine.low %v669, %v693
    %v807 = vcombine.high %v669, %v693
    %v809 = vunpack.c.l.s4 1983009808
    %v810 = vunpack.c.0.s8 %v809
    %v811 = vlaneseq
    %v812 = vshrl.u32 %v811, 7
    %v813 = vsub.s32 %v810, %v812
    %v814 = vrot.slane %v806, %v813
    %v816 = vunpack.c.l.s4 1983009808
    %v817 = vunpack.c.0.s8 %v816
    %v818 = vlaneseq
    %v819 = vshrl.u32 %v818, 7
    %v820 = vsub.s32 %v817, %v819
    %v821 = vrot.slane %v807, %v820
    %v822 = vcombine.low %v681, %v705
    %v823 = vcombine.high %v681, %v705
    %v825 = vunpack.c.l.s4 1983009808
    %v826 = vunpack.c.0.s8 %v825
    %v827 = vlaneseq
    %v828 = vshrl.u32 %v827, 7
    %v829 = vsub.s32 %v826, %v828
    %v830 = vrot.slane %v822, %v829
    %v832 = vunpack.c.l.s4 1983009808
    %v833 = vunpack.c.0.s8 %v832
    %v834 = vlaneseq
    %v835 = vshrl.u32 %v834, 7
    %v836 = vsub.s32 %v833, %v835
    %v837 = vrot.slane %v823, %v836
    %v838 = vcombine.low %v814, %v830
    %v839 = vcombine.high %v814, %v830
    %v841 = vunpack.c.l.s4 1934713408
    %v842 = vunpack.c.0.s8 %v841
    %v843 = vlaneseq
    %v844 = vshrl.u32 %v843, 7
    %v845 = vsub.s32 %v842, %v844
    %v846 = vrot.slane %v838, %v845
    %v848 = vunpack.c.l.s4 1934713408
    %v849 = vunpack.c.0.s8 %v848
    %v850 = vlaneseq
    %v851 = vshrl.u32 %v850, 7
    %v852 = vsub.s32 %v849, %v851
    %v853 = vrot.slane %v839, %v852
    %v854 = vcombine.low %v821, %v837
    %v855 = vcombine.high %v821, %v837
    %v857 = vunpack.c.l.s4 1934713408
    %v858 = vunpack.c.0.s8 %v857
    %v859 = vlaneseq
    %v860 = vshrl.u32 %v859, 7
    %v861 = vsub.s32 %v858, %v860
    %v862 = vrot.slane %v854, %v861
    %v864 = vunpack.c.l.s4 1934713408
    %v865 = vunpack.c.0.s8 %v864
    %v866 = vlaneseq
    %v867 = vshrl.u32 %v866, 7
    %v868 = vsub.s32 %v865, %v867
    %v869 = vrot.slane %v855, %v868
    %v870 = vcombine.high %v846, 0.0
    %v871 = vcombine.high %v853, 0.0
    %v872 = vcombine.high %v862, 0.0
    %v873 = vcombine.high %v869, 0.0
    %v874 = vcombine.low %v671, %v695
    %v875 = vcombine.high %v671, %v695
    %v877 = vunpack.c.l.s4 1983009808
    %v878 = vunpack.c.0.s8 %v877
    %v879 = vlaneseq
    %v880 = vshrl.u32 %v879, 7
    %v881 = vsub.s32 %v878, %v880
    %v882 = vrot.slane %v874, %v881
    %v884 = vunpack.c.l.s4 1983009808
    %v885 = vunpack.c.0.s8 %v884
    %v886 = vlaneseq
    %v887 = vshrl.u32 %v886, 7
    %v888 = vsub.s32 %v885, %v887
    %v889 = vrot.slane %v875, %v888
    %v890 = vcombine.low %v683, %v707
    %v891 = vcombine.high %v683, %v707
    %v893 = vunpack.c.l.s4 1983009808
    %v894 = vunpack.c.0.s8 %v893
    %v895 = vlaneseq
    %v896 = vshrl.u32 %v895, 7
    %v897 = vsub.s32 %v894, %v896
    %v898 = vrot.slane %v890, %v897
    %v900 = vunpack.c.l.s4 1983009808
    %v901 = vunpack.c.0.s8 %v900
    %v902 = vlaneseq
    %v903 = vshrl.u32 %v902, 7
    %v904 = vsub.s32 %v901, %v903
    %v905 = vrot.slane %v891, %v904
    %v906 = vcombine.low %v882, %v898
    %v907 = vcombine.high %v882, %v898
    %v909 = vunpack.c.l.s4 1934713408
    %v910 = vunpack.c.0.s8 %v909
    %v911 = vlaneseq
    %v912 = vshrl.u32 %v911, 7
    %v913 = vsub.s32 %v910, %v912
    %v914 = vrot.slane %v906, %v913
    %v916 = vunpack.c.l.s4 1934713408
    %v917 = vunpack.c.0.s8 %v916
    %v918 = vlaneseq
    %v919 = vshrl.u32 %v918, 7
    %v920 = vsub.s32 %v917, %v919
    %v921 = vrot.slane %v907, %v920
    %v922 = vcombine.low %v889, %v905
    %v923 = vcombine.high %v889, %v905
    %v925 = vunpack.c.l.s4 1934713408
    %v926 = vunpack.c.0.s8 %v925
    %v927 = vlaneseq
    %v928 = vshrl.u32 %v927, 7
    %v929 = vsub.s32 %v926, %v928
    %v930 = vrot.slane %v922, %v929
    %v932 = vunpack.c.l.s4 1934713408
    %v933 = vunpack.c.0.s8 %v932
    %v934 = vlaneseq
    %v935 = vshrl.u32 %v934, 7
    %v936 = vsub.s32 %v933, %v935
    %v937 = vrot.slane %v923, %v936
    %v938 = vcombine.high %v914, 0.0
    %v939 = vcombine.high %v921, 0.0
    %v940 = vcombine.high %v930, 0.0
    %v941 = vcombine.high %v937, 0.0
    %v942 = vcombine.low %v673, %v697
    %v943 = vcombine.high %v673, %v697
    %v945 = vunpack.c.l.s4 1983009808
    %v946 = vunpack.c.0.s8 %v945
    %v947 = vlaneseq
    %v948 = vshrl.u32 %v947, 7
    %v949 = vsub.s32 %v946, %v948
    %v950 = vrot.slane %v942, %v949
    %v952 = vunpack.c.l.s4 1983009808
    %v953 = vunpack.c.0.s8 %v952
    %v954 = vlaneseq
    %v955 = vshrl.u32 %v954, 7
    %v956 = vsub.s32 %v953, %v955
    %v957 = vrot.slane %v943, %v956
    %v958 = vcombine.low %v685, %v709
    %v959 = vcombine.high %v685, %v709
    %v961 = vunpack.c.l.s4 1983009808
    %v962 = vunpack.c.0.s8 %v961
    %v963 = vlaneseq
    %v964 = vshrl.u32 %v963, 7
    %v965 = vsub.s32 %v962, %v964
    %v966 = vrot.slane %v958, %v965
    %v968 = vunpack.c.l.s4 1983009808
    %v969 = vunpack.c.0.s8 %v968
    %v970 = vlaneseq
    %v971 = vshrl.u32 %v970, 7
    %v972 = vsub.s32 %v969, %v971
    %v973 = vrot.slane %v959, %v972
    %v974 = vcombine.low %v950, %v966
    %v975 = vcombine.high %v950, %v966
    %v977 = vunpack.c.l.s4 1934713408
    %v978 = vunpack.c.0.s8 %v977
    %v979 = vlaneseq
    %v980 = vshrl.u32 %v979, 7
    %v981 = vsub.s32 %v978, %v980
    %v982 = vrot.slane %v974, %v981
    %v984 = vunpack.c.l.s4 1934713408
    %v985 = vunpack.c.0.s8 %v984
    %v986 = vlaneseq
    %v987 = vshrl.u32 %v986, 7
    %v988 = vsub.s32 %v985, %v987
    %v989 = vrot.slane %v975, %v988
    %v990 = vcombine.low %v957, %v973
    %v991 = vcombine.high %v957, %v973
    %v993 = vunpack.c.l.s4 1934713408
    %v994 = vunpack.c.0.s8 %v993
    %v995 = vlaneseq
    %v996 = vshrl.u32 %v995, 7
    %v997 = vsub.s32 %v994, %v996
    %v998 = vrot.slane %v990, %v997
    %v1000 = vunpack.c.l.s4 1934713408
    %v1001 = vunpack.c.0.s8 %v1000
    %v1002 = vlaneseq
    %v1003 = vshrl.u32 %v1002, 7
    %v1004 = vsub.s32 %v1001, %v1003
    %v1005 = vrot.slane %v991, %v1004
    %v1006 = vcombine.high %v982, 0.0
    %v1007 = vcombine.high %v989, 0.0
    %v1008 = vcombine.high %v998, 0.0
    %v1009 = vcombine.high %v1005, 0.0
    %v1010 = vcombine.low %v675, %v699
    %v1011 = vcombine.high %v675, %v699
    %v1013 = vunpack.c.l.s4 1983009808
    %v1014 = vunpack.c.0.s8 %v1013
    %v1015 = vlaneseq
    %v1016 = vshrl.u32 %v1015, 7
    %v1017 = vsub.s32 %v1014, %v1016
    %v1018 = vrot.slane %v1010, %v1017
    %v1020 = vunpack.c.l.s4 1983009808
    %v1021 = vunpack.c.0.s8 %v1020
    %v1022 = vlaneseq
    %v1023 = vshrl.u32 %v1022, 7
    %v1024 = vsub.s32 %v1021, %v1023
    %v1025 = vrot.slane %v1011, %v1024
    %v1026 = vcombine.low %v687, %v711
    %v1027 = vcombine.high %v687, %v711
    %v1029 = vunpack.c.l.s4 1983009808
    %v1030 = vunpack.c.0.s8 %v1029
    %v1031 = vlaneseq
    %v1032 = vshrl.u32 %v1031, 7
    %v1033 = vsub.s32 %v1030, %v1032
    %v1034 = vrot.slane %v1026, %v1033
    %v1036 = vunpack.c.l.s4 1983009808
    %v1037 = vunpack.c.0.s8 %v1036
    %v1038 = vlaneseq
    %v1039 = vshrl.u32 %v1038, 7
    %v1040 = vsub.s32 %v1037, %v1039
    %v1041 = vrot.slane %v1027, %v1040
    %v1042 = vcombine.low %v1018, %v1034
    %v1043 = vcombine.high %v1018, %v1034
    %v1045 = vunpack.c.l.s4 1934713408
    %v1046 = vunpack.c.0.s8 %v1045
    %v1047 = vlaneseq
    %v1048 = vshrl.u32 %v1047, 7
    %v1049 = vsub.s32 %v1046, %v1048
    %v1050 = vrot.slane %v1042, %v1049
    %v1052 = vunpack.c.l.s4 1934713408
    %v1053 = vunpack.c.0.s8 %v1052
    %v1054 = vlaneseq
    %v1055 = vshrl.u32 %v1054, 7
    %v1056 = vsub.s32 %v1053, %v1055
    %v1057 = vrot.slane %v1043, %v1056
    %v1058 = vcombine.low %v1025, %v1041
    %v1059 = vcombine.high %v1025, %v1041
    %v1061 = vunpack.c.l.s4 1934713408
    %v1062 = vunpack.c.0.s8 %v1061
    %v1063 = vlaneseq
    %v1064 = vshrl.u32 %v1063, 7
    %v1065 = vsub.s32 %v1062, %v1064
    %v1066 = vrot.slane %v1058, %v1065
    %v1068 = vunpack.c.l.s4 1934713408
    %v1069 = vunpack.c.0.s8 %v1068
    %v1070 = vlaneseq
    %v1071 = vshrl.u32 %v1070, 7
    %v1072 = vsub.s32 %v1069, %v1071
    %v1073 = vrot.slane %v1059, %v1072
    %v1074 = vcombine.high %v1050, 0.0
    %v1075 = vcombine.high %v1057, 0.0
    %v1076 = vcombine.high %v1066, 0.0
    %v1077 = vcombine.high %v1073, 0.0
    %v1078 = vcombine.low %v677, %v701
    %v1079 = vcombine.high %v677, %v701
    %v1081 = vunpack.c.l.s4 1983009808
    %v1082 = vunpack.c.0.s8 %v1081
    %v1083 = vlaneseq
    %v1084 = vshrl.u32 %v1083, 7
    %v1085 = vsub.s32 %v1082, %v1084
    %v1086 = vrot.slane %v1078, %v1085
    %v1088 = vunpack.c.l.s4 1983009808
    %v1089 = vunpack.c.0.s8 %v1088
    %v1090 = vlaneseq
    %v1091 = vshrl.u32 %v1090, 7
    %v1092 = vsub.s32 %v1089, %v1091
    %v1093 = vrot.slane %v1079, %v1092
    %v1094 = vcombine.low %v689, %v713
    %v1095 = vcombine.high %v689, %v713
    %v1097 = vunpack.c.l.s4 1983009808
    %v1098 = vunpack.c.0.s8 %v1097
    %v1099 = vlaneseq
    %v1100 = vshrl.u32 %v1099, 7
    %v1101 = vsub.s32 %v1098, %v1100
    %v1102 = vrot.slane %v1094, %v1101
    %v1104 = vunpack.c.l.s4 1983009808
    %v1105 = vunpack.c.0.s8 %v1104
    %v1106 = vlaneseq
    %v1107 = vshrl.u32 %v1106, 7
    %v1108 = vsub.s32 %v1105, %v1107
    %v1109 = vrot.slane %v1095, %v1108
    %v1110 = vcombine.low %v1086, %v1102
    %v1111 = vcombine.high %v1086, %v1102
    %v1113 = vunpack.c.l.s4 1934713408
    %v1114 = vunpack.c.0.s8 %v1113
    %v1115 = vlaneseq
    %v1116 = vshrl.u32 %v1115, 7
    %v1117 = vsub.s32 %v1114, %v1116
    %v1118 = vrot.slane %v1110, %v1117
    %v1120 = vunpack.c.l.s4 1934713408
    %v1121 = vunpack.c.0.s8 %v1120
    %v1122 = vlaneseq
    %v1123 = vshrl.u32 %v1122, 7
    %v1124 = vsub.s32 %v1121, %v1123
    %v1125 = vrot.slane %v1111, %v1124
    %v1126 = vcombine.low %v1093, %v1109
    %v1127 = vcombine.high %v1093, %v1109
    %v1129 = vunpack.c.l.s4 1934713408
    %v1130 = vunpack.c.0.s8 %v1129
    %v1131 = vlaneseq
    %v1132 = vshrl.u32 %v1131, 7
    %v1133 = vsub.s32 %v1130, %v1132
    %v1134 = vrot.slane %v1126, %v1133
    %v1136 = vunpack.c.l.s4 1934713408
    %v1137 = vunpack.c.0.s8 %v1136
    %v1138 = vlaneseq
    %v1139 = vshrl.u32 %v1138, 7
    %v1140 = vsub.s32 %v1137, %v1139
    %v1141 = vrot.slane %v1127, %v1140
    %v1142 = vcombine.high %v1118, 0.0
    %v1143 = vcombine.high %v1125, 0.0
    %v1144 = vcombine.high %v1134, 0.0
    %v1145 = vcombine.high %v1141, 0.0
    %v1146 = vcombine.low %v778, %v785
    %v1148 = vunpack.c.l.s4 1983009808
    %v1149 = vunpack.c.0.s8 %v1148
    %v1150 = vlaneseq
    %v1151 = vshrl.u32 %v1150, 7
    %v1152 = vsub.s32 %v1149, %v1151
    %v1153 = vrot.slane %v1146, %v1152
    %v1154 = vcombine.low %v802, %v803
    %v1156 = vunpack.c.l.s4 1983009808
    %v1157 = vunpack.c.0.s8 %v1156
    %v1158 = vlaneseq
    %v1159 = vshrl.u32 %v1158, 7
    %v1160 = vsub.s32 %v1157, %v1159
    %v1161 = vrot.slane %v1154, %v1160
    %v1162 = vcombine.low %v794, %v801
    %v1164 = vunpack.c.l.s4 1983009808
    %v1165 = vunpack.c.0.s8 %v1164
    %v1166 = vlaneseq
    %v1167 = vshrl.u32 %v1166, 7
    %v1168 = vsub.s32 %v1165, %v1167
    %v1169 = vrot.slane %v1162, %v1168
    %v1170 = vcombine.low %v804, %v805
    %v1172 = vunpack.c.l.s4 1983009808
    %v1173 = vunpack.c.0.s8 %v1172
    %v1174 = vlaneseq
    %v1175 = vshrl.u32 %v1174, 7
    %v1176 = vsub.s32 %v1173, %v1175
    %v1177 = vrot.slane %v1170, %v1176
    %v1178 = vcombine.low %v1153, %v1161
    %v1179 = vcombine.high %v1153, %v1161
    %v1181 = vunpack.c.l.s4 1934713408
    %v1182 = vunpack.c.0.s8 %v1181
    %v1183 = vlaneseq
    %v1184 = vshrl.u32 %v1183, 7
    %v1185 = vsub.s32 %v1182, %v1184
    %v1186 = vrot.slane %v1178, %v1185
    %v1188 = vunpack.c.l.s4 1934713408
    %v1189 = vunpack.c.0.s8 %v1188
    %v1190 = vlaneseq
    %v1191 = vshrl.u32 %v1190, 7
    %v1192 = vsub.s32 %v1189, %v1191
    %v1193 = vrot.slane %v1179, %v1192
    %v1194 = vcombine.low %v1169, %v1177
    %v1195 = vcombine.high %v1169, %v1177
    %v1197 = vunpack.c.l.s4 1934713408
    %v1198 = vunpack.c.0.s8 %v1197
    %v1199 = vlaneseq
    %v1200 = vshrl.u32 %v1199, 7
    %v1201 = vsub.s32 %v1198, %v1200
    %v1202 = vrot.slane %v1194, %v1201
    %v1204 = vunpack.c.l.s4 1934713408
    %v1205 = vunpack.c.0.s8 %v1204
    %v1206 = vlaneseq
    %v1207 = vshrl.u32 %v1206, 7
    %v1208 = vsub.s32 %v1205, %v1207
    %v1209 = vrot.slane %v1195, %v1208
    %v1210 = vcombine.low %v1186, %v1202
    %v1211 = vcombine.high %v1186, %v1202
    %v1212 = vcombine.low %v1193, %v1209
    %v1213 = vcombine.high %v1193, %v1209
    %v1214 = vcombine.low %v846, %v853
    %v1216 = vunpack.c.l.s4 1983009808
    %v1217 = vunpack.c.0.s8 %v1216
    %v1218 = vlaneseq
    %v1219 = vshrl.u32 %v1218, 7
    %v1220 = vsub.s32 %v1217, %v1219
    %v1221 = vrot.slane %v1214, %v1220
    %v1222 = vcombine.low %v870, %v871
    %v1224 = vunpack.c.l.s4 1983009808
    %v1225 = vunpack.c.0.s8 %v1224
    %v1226 = vlaneseq
    %v1227 = vshrl.u32 %v1226, 7
    %v1228 = vsub.s32 %v1225, %v1227
    %v1229 = vrot.slane %v1222, %v1228
    %v1230 = vcombine.low %v862, %v869
    %v1232 = vunpack.c.l.s4 1983009808
    %v1233 = vunpack.c.0.s8 %v1232
    %v1234 = vlaneseq
    %v1235 = vshrl.u32 %v1234, 7
    %v1236 = vsub.s32 %v1233, %v1235
    %v1237 = vrot.slane %v1230, %v1236
    %v1238 = vcombine.low %v872, %v873
    %v1240 = vunpack.c.l.s4 1983009808
    %v1241 = vunpack.c.0.s8 %v1240
    %v1242 = vlaneseq
    %v1243 = vshrl.u32 %v1242, 7
    %v1244 = vsub.s32 %v1241, %v1243
    %v1245 = vrot.slane %v1238, %v1244
    %v1246 = vcombine.low %v1221, %v1229
    %v1247 = vcombine.high %v1221, %v1229
    %v1249 = vunpack.c.l.s4 1934713408
    %v1250 = vunpack.c.0.s8 %v1249
    %v1251 = vlaneseq
    %v1252 = vshrl.u32 %v1251, 7
    %v1253 = vsub.s32 %v1250, %v1252
    %v1254 = vrot.slane %v1246, %v1253
    %v1256 = vunpack.c.l.s4 1934713408
    %v1257 = vunpack.c.0.s8 %v1256
    %v1258 = vlaneseq
    %v1259 = vshrl.u32 %v1258, 7
    %v1260 = vsub.s32 %v1257, %v1259
    %v1261 = vrot.slane %v1247, %v1260
    %v1262 = vcombine.low %v1237, %v1245
    %v1263 = vcombine.high %v1237, %v1245
    %v1265 = vunpack.c.l.s4 1934713408
    %v1266 = vunpack.c.0.s8 %v1265
    %v1267 = vlaneseq
    %v1268 = vshrl.u32 %v1267, 7
    %v1269 = vsub.s32 %v1266, %v1268
    %v1270 = vrot.slane %v1262, %v1269
    %v1272 = vunpack.c.l.s4 1934713408
    %v1273 = vunpack.c.0.s8 %v1272
    %v1274 = vlaneseq
    %v1275 = vshrl.u32 %v1274, 7
    %v1276 = vsub.s32 %v1273, %v1275
    %v1277 = vrot.slane %v1263, %v1276
    %v1278 = vcombine.low %v1254, %v1270
    %v1279 = vcombine.high %v1254, %v1270
    %v1280 = vcombine.low %v1261, %v1277
    %v1281 = vcombine.high %v1261, %v1277
    %v1282 = vcombine.low %v914, %v921
    %v1284 = vunpack.c.l.s4 1983009808
    %v1285 = vunpack.c.0.s8 %v1284
    %v1286 = vlaneseq
    %v1287 = vshrl.u32 %v1286, 7
    %v1288 = vsub.s32 %v1285, %v1287
    %v1289 = vrot.slane %v1282, %v1288
    %v1290 = vcombine.low %v938, %v939
    %v1292 = vunpack.c.l.s4 1983009808
    %v1293 = vunpack.c.0.s8 %v1292
    %v1294 = vlaneseq
    %v1295 = vshrl.u32 %v1294, 7
    %v1296 = vsub.s32 %v1293, %v1295
    %v1297 = vrot.slane %v1290, %v1296
    %v1298 = vcombine.low %v930, %v937
    %v1300 = vunpack.c.l.s4 1983009808
    %v1301 = vunpack.c.0.s8 %v1300
    %v1302 = vlaneseq
    %v1303 = vshrl.u32 %v1302, 7
    %v1304 = vsub.s32 %v1301, %v1303
    %v1305 = vrot.slane %v1298, %v1304
    %v1306 = vcombine.low %v940, %v941
    %v1308 = vunpack.c.l.s4 1983009808
    %v1309 = vunpack.c.0.s8 %v1308
    %v1310 = vlaneseq
    %v1311 = vshrl.u32 %v1310, 7
    %v1312 = vsub.s32 %v1309, %v1311
    %v1313 = vrot.slane %v1306, %v1312
    %v1314 = vcombine.low %v1289, %v1297
    %v1315 = vcombine.high %v1289, %v1297
    %v1317 = vunpack.c.l.s4 1934713408
    %v1318 = vunpack.c.0.s8 %v1317
    %v1319 = vlaneseq
    %v1320 = vshrl.u32 %v1319, 7
    %v1321 = vsub.s32 %v1318, %v1320
    %v1322 = vrot.slane %v1314, %v1321
    %v1324 = vunpack.c.l.s4 1934713408
    %v1325 = vunpack.c.0.s8 %v1324
    %v1326 = vlaneseq
    %v1327 = vshrl.u32 %v1326, 7
    %v1328 = vsub.s32 %v1325, %v1327
    %v1329 = vrot.slane %v1315, %v1328
    %v1330 = vcombine.low %v1305, %v1313
    %v1331 = vcombine.high %v1305, %v1313
    %v1333 = vunpack.c.l.s4 1934713408
    %v1334 = vunpack.c.0.s8 %v1333
    %v1335 = vlaneseq
    %v1336 = vshrl.u32 %v1335, 7
    %v1337 = vsub.s32 %v1334, %v1336
    %v1338 = vrot.slane %v1330, %v1337
    %v1340 = vunpack.c.l.s4 1934713408
    %v1341 = vunpack.c.0.s8 %v1340
    %v1342 = vlaneseq
    %v1343 = vshrl.u32 %v1342, 7
    %v1344 = vsub.s32 %v1341, %v1343
    %v1345 = vrot.slane %v1331, %v1344
    %v1346 = vcombine.low %v1322, %v1338
    %v1347 = vcombine.high %v1322, %v1338
    %v1348 = vcombine.low %v1329, %v1345
    %v1349 = vcombine.high %v1329, %v1345
    %v1350 = vcombine.low %v982, %v989
    %v1352 = vunpack.c.l.s4 1983009808
    %v1353 = vunpack.c.0.s8 %v1352
    %v1354 = vlaneseq
    %v1355 = vshrl.u32 %v1354, 7
    %v1356 = vsub.s32 %v1353, %v1355
    %v1357 = vrot.slane %v1350, %v1356
    %v1358 = vcombine.low %v1006, %v1007
    %v1360 = vunpack.c.l.s4 1983009808
    %v1361 = vunpack.c.0.s8 %v1360
    %v1362 = vlaneseq
    %v1363 = vshrl.u32 %v1362, 7
    %v1364 = vsub.s32 %v1361, %v1363
    %v1365 = vrot.slane %v1358, %v1364
    %v1366 = vcombine.low %v998, %v1005
    %v1368 = vunpack.c.l.s4 1983009808
    %v1369 = vunpack.c.0.s8 %v1368
    %v1370 = vlaneseq
    %v1371 = vshrl.u32 %v1370, 7
    %v1372 = vsub.s32 %v1369, %v1371
    %v1373 = vrot.slane %v1366, %v1372
    %v1374 = vcombine.low %v1008, %v1009
    %v1376 = vunpack.c.l.s4 1983009808
    %v1377 = vunpack.c.0.s8 %v1376
    %v1378 = vlaneseq
    %v1379 = vshrl.u32 %v1378, 7
    %v1380 = vsub.s32 %v1377, %v1379
    %v1381 = vrot.slane %v1374, %v1380
    %v1382 = vcombine.low %v1357, %v1365
    %v1383 = vcombine.high %v1357, %v1365
    %v1385 = vunpack.c.l.s4 1934713408
    %v1386 = vunpack.c.0.s8 %v1385
    %v1387 = vlaneseq
    %v1388 = vshrl.u32 %v1387, 7
    %v1389 = vsub.s32 %v1386, %v1388
    %v1390 = vrot.slane %v1382, %v1389
    %v1392 = vunpack.c.l.s4 1934713408
    %v1393 = vunpack.c.0.s8 %v1392
    %v1394 = vlaneseq
    %v1395 = vshrl.u32 %v1394, 7
    %v1396 = vsub.s32 %v1393, %v1395
    %v1397 = vrot.slane %v1383, %v1396
    %v1398 = vcombine.low %v1373, %v1381
    %v1399 = vcombine.high %v1373, %v1381
    %v1401 = vunpack.c.l.s4 1934713408
    %v1402 = vunpack.c.0.s8 %v1401
    %v1403 = vlaneseq
    %v1404 = vshrl.u32 %v1403, 7
    %v1405 = vsub.s32 %v1402, %v1404
    %v1406 = vrot.slane %v1398, %v1405
    %v1408 = vunpack.c.l.s4 1934713408
    %v1409 = vunpack.c.0.s8 %v1408
    %v1410 = vlaneseq
    %v1411 = vshrl.u32 %v1410, 7
    %v1412 = vsub.s32 %v1409, %v1411
    %v1413 = vrot.slane %v1399, %v1412
    %v1414 = vcombine.low %v1390, %v1406
    %v1415 = vcombine.high %v1390, %v1406
    %v1416 = vcombine.low %v1397, %v1413
    %v1417 = vcombine.high %v1397, %v1413
    %v1418 = vcombine.low %v1050, %v1057
    %v1420 = vunpack.c.l.s4 1983009808
    %v1421 = vunpack.c.0.s8 %v1420
    %v1422 = vlaneseq
    %v1423 = vshrl.u32 %v1422, 7
    %v1424 = vsub.s32 %v1421, %v1423
    %v1425 = vrot.slane %v1418, %v1424
    %v1426 = vcombine.low %v1074, %v1075
    %v1428 = vunpack.c.l.s4 1983009808
    %v1429 = vunpack.c.0.s8 %v1428
    %v1430 = vlaneseq
    %v1431 = vshrl.u32 %v1430, 7
    %v1432 = vsub.s32 %v1429, %v1431
    %v1433 = vrot.slane %v1426, %v1432
    %v1434 = vcombine.low %v1066, %v1073
    %v1436 = vunpack.c.l.s4 1983009808
    %v1437 = vunpack.c.0.s8 %v1436
    %v1438 = vlaneseq
    %v1439 = vshrl.u32 %v1438, 7
    %v1440 = vsub.s32 %v1437, %v1439
    %v1441 = vrot.slane %v1434, %v1440
    %v1442 = vcombine.low %v1076, %v1077
    %v1444 = vunpack.c.l.s4 1983009808
    %v1445 = vunpack.c.0.s8 %v1444
    %v1446 = vlaneseq
    %v1447 = vshrl.u32 %v1446, 7
    %v1448 = vsub.s32 %v1445, %v1447
    %v1449 = vrot.slane %v1442, %v1448
    %v1450 = vcombine.low %v1425, %v1433
    %v1451 = vcombine.high %v1425, %v1433
    %v1453 = vunpack.c.l.s4 1934713408
    %v1454 = vunpack.c.0.s8 %v1453
    %v1455 = vlaneseq
    %v1456 = vshrl.u32 %v1455, 7
    %v1457 = vsub.s32 %v1454, %v1456
    %v1458 = vrot.slane %v1450, %v1457
    %v1460 = vunpack.c.l.s4 1934713408
    %v1461 = vunpack.c.0.s8 %v1460
    %v1462 = vlaneseq
    %v1463 = vshrl.u32 %v1462, 7
    %v1464 = vsub.s32 %v1461, %v1463
    %v1465 = vrot.slane %v1451, %v1464
    %v1466 = vcombine.low %v1441, %v1449
    %v1467 = vcombine.high %v1441, %v1449
    %v1469 = vunpack.c.l.s4 1934713408
    %v1470 = vunpack.c.0.s8 %v1469
    %v1471 = vlaneseq
    %v1472 = vshrl.u32 %v1471, 7
    %v1473 = vsub.s32 %v1470, %v1472
    %v1474 = vrot.slane %v1466, %v1473
    %v1476 = vunpack.c.l.s4 1934713408
    %v1477 = vunpack.c.0.s8 %v1476
    %v1478 = vlaneseq
    %v1479 = vshrl.u32 %v1478, 7
    %v1480 = vsub.s32 %v1477, %v1479
    %v1481 = vrot.slane %v1467, %v1480
    %v1482 = vcombine.low %v1458, %v1474
    %v1483 = vcombine.high %v1458, %v1474
    %v1484 = vcombine.low %v1465, %v1481
    %v1485 = vcombine.high %v1465, %v1481
    %v1486 = vcombine.low %v1118, %v1125
    %v1488 = vunpack.c.l.s4 1983009808
    %v1489 = vunpack.c.0.s8 %v1488
    %v1490 = vlaneseq
    %v1491 = vshrl.u32 %v1490, 7
    %v1492 = vsub.s32 %v1489, %v1491
    %v1493 = vrot.slane %v1486, %v1492
    %v1494 = vcombine.low %v1142, %v1143
    %v1496 = vunpack.c.l.s4 1983009808
    %v1497 = vunpack.c.0.s8 %v1496
    %v1498 = vlaneseq
    %v1499 = vshrl.u32 %v1498, 7
    %v1500 = vsub.s32 %v1497, %v1499
    %v1501 = vrot.slane %v1494, %v1500
    %v1502 = vcombine.low %v1134, %v1141
    %v1504 = vunpack.c.l.s4 1983009808
    %v1505 = vunpack.c.0.s8 %v1504
    %v1506 = vlaneseq
    %v1507 = vshrl.u32 %v1506, 7
    %v1508 = vsub.s32 %v1505, %v1507
    %v1509 = vrot.slane %v1502, %v1508
    %v1510 = vcombine.low %v1144, %v1145
    %v1512 = vunpack.c.l.s4 1983009808
    %v1513 = vunpack.c.0.s8 %v1512
    %v1514 = vlaneseq
    %v1515 = vshrl.u32 %v1514, 7
    %v1516 = vsub.s32 %v1513, %v1515
    %v1517 = vrot.slane %v1510, %v1516
    %v1518 = vcombine.low %v1493, %v1501
    %v1519 = vcombine.high %v1493, %v1501
    %v1521 = vunpack.c.l.s4 1934713408
    %v1522 = vunpack.c.0.s8 %v1521
    %v1523 = vlaneseq
    %v1524 = vshrl.u32 %v1523, 7
    %v1525 = vsub.s32 %v1522, %v1524
    %v1526 = vrot.slane %v1518, %v1525
    %v1528 = vunpack.c.l.s4 1934713408
    %v1529 = vunpack.c.0.s8 %v1528
    %v1530 = vlaneseq
    %v1531 = vshrl.u32 %v1530, 7
    %v1532 = vsub.s32 %v1529, %v1531
    %v1533 = vrot.slane %v1519, %v1532
    %v1534 = vcombine.low %v1509, %v1517
    %v1535 = vcombine.high %v1509, %v1517
    %v1537 = vunpack.c.l.s4 1934713408
    %v1538 = vunpack.c.0.s8 %v1537
    %v1539 = vlaneseq
    %v1540 = vshrl.u32 %v1539, 7
    %v1541 = vsub.s32 %v1538, %v1540
    %v1542 = vrot.slane %v1534, %v1541
    %v1544 = vunpack.c.l.s4 1934713408
    %v1545 = vunpack.c.0.s8 %v1544
    %v1546 = vlaneseq
    %v1547 = vshrl.u32 %v1546, 7
    %v1548 = vsub.s32 %v1545, %v1547
    %v1549 = vrot.slane %v1535, %v1548
    %v1550 = vcombine.low %v1526, %v1542
    %v1551 = vcombine.high %v1526, %v1542
    %v1552 = vcombine.low %v1533, %v1549
    %v1553 = vcombine.high %v1533, %v1549
    %v1554 = vpack.c.bf16 %v1278, %v1210
    %v1555 = vpack.c.bf16 %v1414, %v1346
    %v1556 = vpack.c.bf16 %v1550, %v1482
    %v1557 = vpack.c.bf16 %v1279, %v1211
    %v1558 = vpack.c.bf16 %v1415, %v1347
    %v1559 = vpack.c.bf16 %v1551, %v1483
    %v1560 = vpack.c.bf16 %v1280, %v1212
    %v1561 = vpack.c.bf16 %v1416, %v1348
    %v1562 = vpack.c.bf16 %v1552, %v1484
    %v1563 = vpack.c.bf16 %v1281, %v1213
    %v1564 = vpack.c.bf16 %v1417, %v1349
    %v1565 = vpack.c.bf16 %v1553, %v1485
    %1570 = vrot.lane.b32.xlu0 %v204, 120
    %v1571 = vpop.permute.xlu0 %1570
    %1572 = vrot.lane.b32.xlu0 %v207, 120
    %v1573 = vpop.permute.xlu0 %1572
    %1574 = vrot.lane.b32.xlu0 %v212, 120
    %v1575 = vpop.permute.xlu0 %1574
    %1576 = vrot.lane.b32.xlu0 %v215, 120
    %v1577 = vpop.permute.xlu0 %1576
    %1578 = vrot.lane.b32.xlu0 %v204, 112
    %v1579 = vpop.permute.xlu0 %1578
    %1580 = vrot.lane.b32.xlu0 %v207, 112
    %v1581 = vpop.permute.xlu0 %1580
    %1582 = vrot.lane.b32.xlu0 %v212, 112
    %v1583 = vpop.permute.xlu0 %1582
    %1584 = vrot.lane.b32.xlu0 %v215, 112
    %v1585 = vpop.permute.xlu0 %1584
    %1586 = vrot.lane.b32.xlu0 %v204, 104
    %v1587 = vpop.permute.xlu0 %1586
    %1588 = vrot.lane.b32.xlu0 %v207, 104
    %v1589 = vpop.permute.xlu0 %1588
    %1590 = vrot.lane.b32.xlu0 %v212, 104
    %v1591 = vpop.permute.xlu0 %1590
    %1592 = vrot.lane.b32.xlu0 %v215, 104
    %v1593 = vpop.permute.xlu0 %1592
    %1594 = vrot.lane.b32.xlu0 %v204, 64
    %v1595 = vpop.permute.xlu0 %1594
    %1596 = vrot.lane.b32.xlu0 %v207, 64
    %v1597 = vpop.permute.xlu0 %1596
    %1598 = vrot.lane.b32.xlu0 %v212, 64
    %v1599 = vpop.permute.xlu0 %1598
    %1600 = vrot.lane.b32.xlu0 %v215, 64
    %v1601 = vpop.permute.xlu0 %1600
    %1602 = vrot.lane.b32.xlu0 %v220, 64
    %v1603 = vpop.permute.xlu0 %1602
    %1604 = vrot.lane.b32.xlu0 %v223, 64
    %v1605 = vpop.permute.xlu0 %1604
    %1606 = vrot.lane.b32.xlu0 %v1571, 64
    %v1607 = vpop.permute.xlu0 %1606
    %1608 = vrot.lane.b32.xlu0 %v1573, 64
    %v1609 = vpop.permute.xlu0 %1608
    %1610 = vrot.lane.b32.xlu0 %v1575, 64
    %v1611 = vpop.permute.xlu0 %1610
    %1612 = vrot.lane.b32.xlu0 %v1577, 64
    %v1613 = vpop.permute.xlu0 %1612
    %1614 = vrot.lane.b32.xlu0 %v331, 64
    %v1615 = vpop.permute.xlu0 %1614
    %1616 = vrot.lane.b32.xlu0 %v333, 64
    %v1617 = vpop.permute.xlu0 %1616
    %1618 = vrot.lane.b32.xlu0 %v1579, 64
    %v1619 = vpop.permute.xlu0 %1618
    %1620 = vrot.lane.b32.xlu0 %v1581, 64
    %v1621 = vpop.permute.xlu0 %1620
    %1622 = vrot.lane.b32.xlu0 %v1583, 64
    %v1623 = vpop.permute.xlu0 %1622
    %1624 = vrot.lane.b32.xlu0 %v1585, 64
    %v1625 = vpop.permute.xlu0 %1624
    %1626 = vrot.lane.b32.xlu0 %v337, 64
    %v1627 = vpop.permute.xlu0 %1626
    %1628 = vrot.lane.b32.xlu0 %v339, 64
    %v1629 = vpop.permute.xlu0 %1628
    %1630 = vrot.lane.b32.xlu0 %v1587, 64
    %v1631 = vpop.permute.xlu0 %1630
    %1632 = vrot.lane.b32.xlu0 %v1589, 64
    %v1633 = vpop.permute.xlu0 %1632
    %1634 = vrot.lane.b32.xlu0 %v1591, 64
    %v1635 = vpop.permute.xlu0 %1634
    %1636 = vrot.lane.b32.xlu0 %v1593, 64
    %v1637 = vpop.permute.xlu0 %1636
    %1638 = vrot.lane.b32.xlu0 %v343, 64
    %v1639 = vpop.permute.xlu0 %1638
    %1640 = vrot.lane.b32.xlu0 %v345, 64
    %v1641 = vpop.permute.xlu0 %1640
    %v1666 = vcombine.low %v1595, %v1619
    %v1667 = vcombine.high %v1595, %v1619
    %v1669 = vunpack.c.l.s4 1983009808
    %v1670 = vunpack.c.0.s8 %v1669
    %v1671 = vlaneseq
    %v1672 = vshrl.u32 %v1671, 7
    %v1673 = vsub.s32 %v1670, %v1672
    %v1674 = vrot.slane %v1666, %v1673
    %v1676 = vunpack.c.l.s4 1983009808
    %v1677 = vunpack.c.0.s8 %v1676
    %v1678 = vlaneseq
    %v1679 = vshrl.u32 %v1678, 7
    %v1680 = vsub.s32 %v1677, %v1679
    %v1681 = vrot.slane %v1667, %v1680
    %v1682 = vcombine.low %v1607, %v1631
    %v1683 = vcombine.high %v1607, %v1631
    %v1685 = vunpack.c.l.s4 1983009808
    %v1686 = vunpack.c.0.s8 %v1685
    %v1687 = vlaneseq
    %v1688 = vshrl.u32 %v1687, 7
    %v1689 = vsub.s32 %v1686, %v1688
    %v1690 = vrot.slane %v1682, %v1689
    %v1692 = vunpack.c.l.s4 1983009808
    %v1693 = vunpack.c.0.s8 %v1692
    %v1694 = vlaneseq
    %v1695 = vshrl.u32 %v1694, 7
    %v1696 = vsub.s32 %v1693, %v1695
    %v1697 = vrot.slane %v1683, %v1696
    %v1698 = vcombine.low %v1674, %v1690
    %v1699 = vcombine.high %v1674, %v1690
    %v1701 = vunpack.c.l.s4 1934713408
    %v1702 = vunpack.c.0.s8 %v1701
    %v1703 = vlaneseq
    %v1704 = vshrl.u32 %v1703, 7
    %v1705 = vsub.s32 %v1702, %v1704
    %v1706 = vrot.slane %v1698, %v1705
    %v1708 = vunpack.c.l.s4 1934713408
    %v1709 = vunpack.c.0.s8 %v1708
    %v1710 = vlaneseq
    %v1711 = vshrl.u32 %v1710, 7
    %v1712 = vsub.s32 %v1709, %v1711
    %v1713 = vrot.slane %v1699, %v1712
    %v1714 = vcombine.low %v1681, %v1697
    %v1715 = vcombine.high %v1681, %v1697
    %v1717 = vunpack.c.l.s4 1934713408
    %v1718 = vunpack.c.0.s8 %v1717
    %v1719 = vlaneseq
    %v1720 = vshrl.u32 %v1719, 7
    %v1721 = vsub.s32 %v1718, %v1720
    %v1722 = vrot.slane %v1714, %v1721
    %v1724 = vunpack.c.l.s4 1934713408
    %v1725 = vunpack.c.0.s8 %v1724
    %v1726 = vlaneseq
    %v1727 = vshrl.u32 %v1726, 7
    %v1728 = vsub.s32 %v1725, %v1727
    %v1729 = vrot.slane %v1715, %v1728
    %v1730 = vcombine.high %v1706, 0.0
    %v1731 = vcombine.high %v1713, 0.0
    %v1732 = vcombine.high %v1722, 0.0
    %v1733 = vcombine.high %v1729, 0.0
    %v1734 = vcombine.low %v1597, %v1621
    %v1735 = vcombine.high %v1597, %v1621
    %v1737 = vunpack.c.l.s4 1983009808
    %v1738 = vunpack.c.0.s8 %v1737
    %v1739 = vlaneseq
    %v1740 = vshrl.u32 %v1739, 7
    %v1741 = vsub.s32 %v1738, %v1740
    %v1742 = vrot.slane %v1734, %v1741
    %v1744 = vunpack.c.l.s4 1983009808
    %v1745 = vunpack.c.0.s8 %v1744
    %v1746 = vlaneseq
    %v1747 = vshrl.u32 %v1746, 7
    %v1748 = vsub.s32 %v1745, %v1747
    %v1749 = vrot.slane %v1735, %v1748
    %v1750 = vcombine.low %v1609, %v1633
    %v1751 = vcombine.high %v1609, %v1633
    %v1753 = vunpack.c.l.s4 1983009808
    %v1754 = vunpack.c.0.s8 %v1753
    %v1755 = vlaneseq
    %v1756 = vshrl.u32 %v1755, 7
    %v1757 = vsub.s32 %v1754, %v1756
    %v1758 = vrot.slane %v1750, %v1757
    %v1760 = vunpack.c.l.s4 1983009808
    %v1761 = vunpack.c.0.s8 %v1760
    %v1762 = vlaneseq
    %v1763 = vshrl.u32 %v1762, 7
    %v1764 = vsub.s32 %v1761, %v1763
    %v1765 = vrot.slane %v1751, %v1764
    %v1766 = vcombine.low %v1742, %v1758
    %v1767 = vcombine.high %v1742, %v1758
    %v1769 = vunpack.c.l.s4 1934713408
    %v1770 = vunpack.c.0.s8 %v1769
    %v1771 = vlaneseq
    %v1772 = vshrl.u32 %v1771, 7
    %v1773 = vsub.s32 %v1770, %v1772
    %v1774 = vrot.slane %v1766, %v1773
    %v1776 = vunpack.c.l.s4 1934713408
    %v1777 = vunpack.c.0.s8 %v1776
    %v1778 = vlaneseq
    %v1779 = vshrl.u32 %v1778, 7
    %v1780 = vsub.s32 %v1777, %v1779
    %v1781 = vrot.slane %v1767, %v1780
    %v1782 = vcombine.low %v1749, %v1765
    %v1783 = vcombine.high %v1749, %v1765
    %v1785 = vunpack.c.l.s4 1934713408
    %v1786 = vunpack.c.0.s8 %v1785
    %v1787 = vlaneseq
    %v1788 = vshrl.u32 %v1787, 7
    %v1789 = vsub.s32 %v1786, %v1788
    %v1790 = vrot.slane %v1782, %v1789
    %v1792 = vunpack.c.l.s4 1934713408
    %v1793 = vunpack.c.0.s8 %v1792
    %v1794 = vlaneseq
    %v1795 = vshrl.u32 %v1794, 7
    %v1796 = vsub.s32 %v1793, %v1795
    %v1797 = vrot.slane %v1783, %v1796
    %v1798 = vcombine.high %v1774, 0.0
    %v1799 = vcombine.high %v1781, 0.0
    %v1800 = vcombine.high %v1790, 0.0
    %v1801 = vcombine.high %v1797, 0.0
    %v1802 = vcombine.low %v1599, %v1623
    %v1803 = vcombine.high %v1599, %v1623
    %v1805 = vunpack.c.l.s4 1983009808
    %v1806 = vunpack.c.0.s8 %v1805
    %v1807 = vlaneseq
    %v1808 = vshrl.u32 %v1807, 7
    %v1809 = vsub.s32 %v1806, %v1808
    %v1810 = vrot.slane %v1802, %v1809
    %v1812 = vunpack.c.l.s4 1983009808
    %v1813 = vunpack.c.0.s8 %v1812
    %v1814 = vlaneseq
    %v1815 = vshrl.u32 %v1814, 7
    %v1816 = vsub.s32 %v1813, %v1815
    %v1817 = vrot.slane %v1803, %v1816
    %v1818 = vcombine.low %v1611, %v1635
    %v1819 = vcombine.high %v1611, %v1635
    %v1821 = vunpack.c.l.s4 1983009808
    %v1822 = vunpack.c.0.s8 %v1821
    %v1823 = vlaneseq
    %v1824 = vshrl.u32 %v1823, 7
    %v1825 = vsub.s32 %v1822, %v1824
    %v1826 = vrot.slane %v1818, %v1825
    %v1828 = vunpack.c.l.s4 1983009808
    %v1829 = vunpack.c.0.s8 %v1828
    %v1830 = vlaneseq
    %v1831 = vshrl.u32 %v1830, 7
    %v1832 = vsub.s32 %v1829, %v1831
    %v1833 = vrot.slane %v1819, %v1832
    %v1834 = vcombine.low %v1810, %v1826
    %v1835 = vcombine.high %v1810, %v1826
    %v1837 = vunpack.c.l.s4 1934713408
    %v1838 = vunpack.c.0.s8 %v1837
    %v1839 = vlaneseq
    %v1840 = vshrl.u32 %v1839, 7
    %v1841 = vsub.s32 %v1838, %v1840
    %v1842 = vrot.slane %v1834, %v1841
    %v1844 = vunpack.c.l.s4 1934713408
    %v1845 = vunpack.c.0.s8 %v1844
    %v1846 = vlaneseq
    %v1847 = vshrl.u32 %v1846, 7
    %v1848 = vsub.s32 %v1845, %v1847
    %v1849 = vrot.slane %v1835, %v1848
    %v1850 = vcombine.low %v1817, %v1833
    %v1851 = vcombine.high %v1817, %v1833
    %v1853 = vunpack.c.l.s4 1934713408
    %v1854 = vunpack.c.0.s8 %v1853
    %v1855 = vlaneseq
    %v1856 = vshrl.u32 %v1855, 7
    %v1857 = vsub.s32 %v1854, %v1856
    %v1858 = vrot.slane %v1850, %v1857
    %v1860 = vunpack.c.l.s4 1934713408
    %v1861 = vunpack.c.0.s8 %v1860
    %v1862 = vlaneseq
    %v1863 = vshrl.u32 %v1862, 7
    %v1864 = vsub.s32 %v1861, %v1863
    %v1865 = vrot.slane %v1851, %v1864
    %v1866 = vcombine.high %v1842, 0.0
    %v1867 = vcombine.high %v1849, 0.0
    %v1868 = vcombine.high %v1858, 0.0
    %v1869 = vcombine.high %v1865, 0.0
    %v1870 = vcombine.low %v1601, %v1625
    %v1871 = vcombine.high %v1601, %v1625
    %v1873 = vunpack.c.l.s4 1983009808
    %v1874 = vunpack.c.0.s8 %v1873
    %v1875 = vlaneseq
    %v1876 = vshrl.u32 %v1875, 7
    %v1877 = vsub.s32 %v1874, %v1876
    %v1878 = vrot.slane %v1870, %v1877
    %v1880 = vunpack.c.l.s4 1983009808
    %v1881 = vunpack.c.0.s8 %v1880
    %v1882 = vlaneseq
    %v1883 = vshrl.u32 %v1882, 7
    %v1884 = vsub.s32 %v1881, %v1883
    %v1885 = vrot.slane %v1871, %v1884
    %v1886 = vcombine.low %v1613, %v1637
    %v1887 = vcombine.high %v1613, %v1637
    %v1889 = vunpack.c.l.s4 1983009808
    %v1890 = vunpack.c.0.s8 %v1889
    %v1891 = vlaneseq
    %v1892 = vshrl.u32 %v1891, 7
    %v1893 = vsub.s32 %v1890, %v1892
    %v1894 = vrot.slane %v1886, %v1893
    %v1896 = vunpack.c.l.s4 1983009808
    %v1897 = vunpack.c.0.s8 %v1896
    %v1898 = vlaneseq
    %v1899 = vshrl.u32 %v1898, 7
    %v1900 = vsub.s32 %v1897, %v1899
    %v1901 = vrot.slane %v1887, %v1900
    %v1902 = vcombine.low %v1878, %v1894
    %v1903 = vcombine.high %v1878, %v1894
    %v1905 = vunpack.c.l.s4 1934713408
    %v1906 = vunpack.c.0.s8 %v1905
    %v1907 = vlaneseq
    %v1908 = vshrl.u32 %v1907, 7
    %v1909 = vsub.s32 %v1906, %v1908
    %v1910 = vrot.slane %v1902, %v1909
    %v1912 = vunpack.c.l.s4 1934713408
    %v1913 = vunpack.c.0.s8 %v1912
    %v1914 = vlaneseq
    %v1915 = vshrl.u32 %v1914, 7
    %v1916 = vsub.s32 %v1913, %v1915
    %v1917 = vrot.slane %v1903, %v1916
    %v1918 = vcombine.low %v1885, %v1901
    %v1919 = vcombine.high %v1885, %v1901
    %v1921 = vunpack.c.l.s4 1934713408
    %v1922 = vunpack.c.0.s8 %v1921
    %v1923 = vlaneseq
    %v1924 = vshrl.u32 %v1923, 7
    %v1925 = vsub.s32 %v1922, %v1924
    %v1926 = vrot.slane %v1918, %v1925
    %v1928 = vunpack.c.l.s4 1934713408
    %v1929 = vunpack.c.0.s8 %v1928
    %v1930 = vlaneseq
    %v1931 = vshrl.u32 %v1930, 7
    %v1932 = vsub.s32 %v1929, %v1931
    %v1933 = vrot.slane %v1919, %v1932
    %v1934 = vcombine.high %v1910, 0.0
    %v1935 = vcombine.high %v1917, 0.0
    %v1936 = vcombine.high %v1926, 0.0
    %v1937 = vcombine.high %v1933, 0.0
    %v1938 = vcombine.low %v1603, %v1627
    %v1939 = vcombine.high %v1603, %v1627
    %v1941 = vunpack.c.l.s4 1983009808
    %v1942 = vunpack.c.0.s8 %v1941
    %v1943 = vlaneseq
    %v1944 = vshrl.u32 %v1943, 7
    %v1945 = vsub.s32 %v1942, %v1944
    %v1946 = vrot.slane %v1938, %v1945
    %v1948 = vunpack.c.l.s4 1983009808
    %v1949 = vunpack.c.0.s8 %v1948
    %v1950 = vlaneseq
    %v1951 = vshrl.u32 %v1950, 7
    %v1952 = vsub.s32 %v1949, %v1951
    %v1953 = vrot.slane %v1939, %v1952
    %v1954 = vcombine.low %v1615, %v1639
    %v1955 = vcombine.high %v1615, %v1639
    %v1957 = vunpack.c.l.s4 1983009808
    %v1958 = vunpack.c.0.s8 %v1957
    %v1959 = vlaneseq
    %v1960 = vshrl.u32 %v1959, 7
    %v1961 = vsub.s32 %v1958, %v1960
    %v1962 = vrot.slane %v1954, %v1961
    %v1964 = vunpack.c.l.s4 1983009808
    %v1965 = vunpack.c.0.s8 %v1964
    %v1966 = vlaneseq
    %v1967 = vshrl.u32 %v1966, 7
    %v1968 = vsub.s32 %v1965, %v1967
    %v1969 = vrot.slane %v1955, %v1968
    %v1970 = vcombine.low %v1946, %v1962
    %v1971 = vcombine.high %v1946, %v1962
    %v1973 = vunpack.c.l.s4 1934713408
    %v1974 = vunpack.c.0.s8 %v1973
    %v1975 = vlaneseq
    %v1976 = vshrl.u32 %v1975, 7
    %v1977 = vsub.s32 %v1974, %v1976
    %v1978 = vrot.slane %v1970, %v1977
    %v1980 = vunpack.c.l.s4 1934713408
    %v1981 = vunpack.c.0.s8 %v1980
    %v1982 = vlaneseq
    %v1983 = vshrl.u32 %v1982, 7
    %v1984 = vsub.s32 %v1981, %v1983
    %v1985 = vrot.slane %v1971, %v1984
    %v1986 = vcombine.low %v1953, %v1969
    %v1987 = vcombine.high %v1953, %v1969
    %v1989 = vunpack.c.l.s4 1934713408
    %v1990 = vunpack.c.0.s8 %v1989
    %v1991 = vlaneseq
    %v1992 = vshrl.u32 %v1991, 7
    %v1993 = vsub.s32 %v1990, %v1992
    %v1994 = vrot.slane %v1986, %v1993
    %v1996 = vunpack.c.l.s4 1934713408
    %v1997 = vunpack.c.0.s8 %v1996
    %v1998 = vlaneseq
    %v1999 = vshrl.u32 %v1998, 7
    %v2000 = vsub.s32 %v1997, %v1999
    %v2001 = vrot.slane %v1987, %v2000
    %v2002 = vcombine.high %v1978, 0.0
    %v2003 = vcombine.high %v1985, 0.0
    %v2004 = vcombine.high %v1994, 0.0
    %v2005 = vcombine.high %v2001, 0.0
    %v2006 = vcombine.low %v1605, %v1629
    %v2007 = vcombine.high %v1605, %v1629
    %v2009 = vunpack.c.l.s4 1983009808
    %v2010 = vunpack.c.0.s8 %v2009
    %v2011 = vlaneseq
    %v2012 = vshrl.u32 %v2011, 7
    %v2013 = vsub.s32 %v2010, %v2012
    %v2014 = vrot.slane %v2006, %v2013
    %v2016 = vunpack.c.l.s4 1983009808
    %v2017 = vunpack.c.0.s8 %v2016
    %v2018 = vlaneseq
    %v2019 = vshrl.u32 %v2018, 7
    %v2020 = vsub.s32 %v2017, %v2019
    %v2021 = vrot.slane %v2007, %v2020
    %v2022 = vcombine.low %v1617, %v1641
    %v2023 = vcombine.high %v1617, %v1641
    %v2025 = vunpack.c.l.s4 1983009808
    %v2026 = vunpack.c.0.s8 %v2025
    %v2027 = vlaneseq
    %v2028 = vshrl.u32 %v2027, 7
    %v2029 = vsub.s32 %v2026, %v2028
    %v2030 = vrot.slane %v2022, %v2029
    %v2032 = vunpack.c.l.s4 1983009808
    %v2033 = vunpack.c.0.s8 %v2032
    %v2034 = vlaneseq
    %v2035 = vshrl.u32 %v2034, 7
    %v2036 = vsub.s32 %v2033, %v2035
    %v2037 = vrot.slane %v2023, %v2036
    %v2038 = vcombine.low %v2014, %v2030
    %v2039 = vcombine.high %v2014, %v2030
    %v2041 = vunpack.c.l.s4 1934713408
    %v2042 = vunpack.c.0.s8 %v2041
    %v2043 = vlaneseq
    %v2044 = vshrl.u32 %v2043, 7
    %v2045 = vsub.s32 %v2042, %v2044
    %v2046 = vrot.slane %v2038, %v2045
    %v2048 = vunpack.c.l.s4 1934713408
    %v2049 = vunpack.c.0.s8 %v2048
    %v2050 = vlaneseq
    %v2051 = vshrl.u32 %v2050, 7
    %v2052 = vsub.s32 %v2049, %v2051
    %v2053 = vrot.slane %v2039, %v2052
    %v2054 = vcombine.low %v2021, %v2037
    %v2055 = vcombine.high %v2021, %v2037
    %v2057 = vunpack.c.l.s4 1934713408
    %v2058 = vunpack.c.0.s8 %v2057
    %v2059 = vlaneseq
    %v2060 = vshrl.u32 %v2059, 7
    %v2061 = vsub.s32 %v2058, %v2060
    %v2062 = vrot.slane %v2054, %v2061
    %v2064 = vunpack.c.l.s4 1934713408
    %v2065 = vunpack.c.0.s8 %v2064
    %v2066 = vlaneseq
    %v2067 = vshrl.u32 %v2066, 7
    %v2068 = vsub.s32 %v2065, %v2067
    %v2069 = vrot.slane %v2055, %v2068
    %v2070 = vcombine.high %v2046, 0.0
    %v2071 = vcombine.high %v2053, 0.0
    %v2072 = vcombine.high %v2062, 0.0
    %v2073 = vcombine.high %v2069, 0.0
    %v2074 = vcombine.low %v1706, %v1713
    %v2076 = vunpack.c.l.s4 1983009808
    %v2077 = vunpack.c.0.s8 %v2076
    %v2078 = vlaneseq
    %v2079 = vshrl.u32 %v2078, 7
    %v2080 = vsub.s32 %v2077, %v2079
    %v2081 = vrot.slane %v2074, %v2080
    %v2082 = vcombine.low %v1730, %v1731
    %v2084 = vunpack.c.l.s4 1983009808
    %v2085 = vunpack.c.0.s8 %v2084
    %v2086 = vlaneseq
    %v2087 = vshrl.u32 %v2086, 7
    %v2088 = vsub.s32 %v2085, %v2087
    %v2089 = vrot.slane %v2082, %v2088
    %v2090 = vcombine.low %v1722, %v1729
    %v2092 = vunpack.c.l.s4 1983009808
    %v2093 = vunpack.c.0.s8 %v2092
    %v2094 = vlaneseq
    %v2095 = vshrl.u32 %v2094, 7
    %v2096 = vsub.s32 %v2093, %v2095
    %v2097 = vrot.slane %v2090, %v2096
    %v2098 = vcombine.low %v1732, %v1733
    %v2100 = vunpack.c.l.s4 1983009808
    %v2101 = vunpack.c.0.s8 %v2100
    %v2102 = vlaneseq
    %v2103 = vshrl.u32 %v2102, 7
    %v2104 = vsub.s32 %v2101, %v2103
    %v2105 = vrot.slane %v2098, %v2104
    %v2106 = vcombine.low %v2081, %v2089
    %v2107 = vcombine.high %v2081, %v2089
    %v2109 = vunpack.c.l.s4 1934713408
    %v2110 = vunpack.c.0.s8 %v2109
    %v2111 = vlaneseq
    %v2112 = vshrl.u32 %v2111, 7
    %v2113 = vsub.s32 %v2110, %v2112
    %v2114 = vrot.slane %v2106, %v2113
    %v2116 = vunpack.c.l.s4 1934713408
    %v2117 = vunpack.c.0.s8 %v2116
    %v2118 = vlaneseq
    %v2119 = vshrl.u32 %v2118, 7
    %v2120 = vsub.s32 %v2117, %v2119
    %v2121 = vrot.slane %v2107, %v2120
    %v2122 = vcombine.low %v2097, %v2105
    %v2123 = vcombine.high %v2097, %v2105
    %v2125 = vunpack.c.l.s4 1934713408
    %v2126 = vunpack.c.0.s8 %v2125
    %v2127 = vlaneseq
    %v2128 = vshrl.u32 %v2127, 7
    %v2129 = vsub.s32 %v2126, %v2128
    %v2130 = vrot.slane %v2122, %v2129
    %v2132 = vunpack.c.l.s4 1934713408
    %v2133 = vunpack.c.0.s8 %v2132
    %v2134 = vlaneseq
    %v2135 = vshrl.u32 %v2134, 7
    %v2136 = vsub.s32 %v2133, %v2135
    %v2137 = vrot.slane %v2123, %v2136
    %v2138 = vcombine.low %v2114, %v2130
    %v2139 = vcombine.high %v2114, %v2130
    %v2140 = vcombine.low %v2121, %v2137
    %v2141 = vcombine.high %v2121, %v2137
    %v2142 = vcombine.low %v1774, %v1781
    %v2144 = vunpack.c.l.s4 1983009808
    %v2145 = vunpack.c.0.s8 %v2144
    %v2146 = vlaneseq
    %v2147 = vshrl.u32 %v2146, 7
    %v2148 = vsub.s32 %v2145, %v2147
    %v2149 = vrot.slane %v2142, %v2148
    %v2150 = vcombine.low %v1798, %v1799
    %v2152 = vunpack.c.l.s4 1983009808
    %v2153 = vunpack.c.0.s8 %v2152
    %v2154 = vlaneseq
    %v2155 = vshrl.u32 %v2154, 7
    %v2156 = vsub.s32 %v2153, %v2155
    %v2157 = vrot.slane %v2150, %v2156
    %v2158 = vcombine.low %v1790, %v1797
    %v2160 = vunpack.c.l.s4 1983009808
    %v2161 = vunpack.c.0.s8 %v2160
    %v2162 = vlaneseq
    %v2163 = vshrl.u32 %v2162, 7
    %v2164 = vsub.s32 %v2161, %v2163
    %v2165 = vrot.slane %v2158, %v2164
    %v2166 = vcombine.low %v1800, %v1801
    %v2168 = vunpack.c.l.s4 1983009808
    %v2169 = vunpack.c.0.s8 %v2168
    %v2170 = vlaneseq
    %v2171 = vshrl.u32 %v2170, 7
    %v2172 = vsub.s32 %v2169, %v2171
    %v2173 = vrot.slane %v2166, %v2172
    %v2174 = vcombine.low %v2149, %v2157
    %v2175 = vcombine.high %v2149, %v2157
    %v2177 = vunpack.c.l.s4 1934713408
    %v2178 = vunpack.c.0.s8 %v2177
    %v2179 = vlaneseq
    %v2180 = vshrl.u32 %v2179, 7
    %v2181 = vsub.s32 %v2178, %v2180
    %v2182 = vrot.slane %v2174, %v2181
    %v2184 = vunpack.c.l.s4 1934713408
    %v2185 = vunpack.c.0.s8 %v2184
    %v2186 = vlaneseq
    %v2187 = vshrl.u32 %v2186, 7
    %v2188 = vsub.s32 %v2185, %v2187
    %v2189 = vrot.slane %v2175, %v2188
    %v2190 = vcombine.low %v2165, %v2173
    %v2191 = vcombine.high %v2165, %v2173
    %v2193 = vunpack.c.l.s4 1934713408
    %v2194 = vunpack.c.0.s8 %v2193
    %v2195 = vlaneseq
    %v2196 = vshrl.u32 %v2195, 7
    %v2197 = vsub.s32 %v2194, %v2196
    %v2198 = vrot.slane %v2190, %v2197
    %v2200 = vunpack.c.l.s4 1934713408
    %v2201 = vunpack.c.0.s8 %v2200
    %v2202 = vlaneseq
    %v2203 = vshrl.u32 %v2202, 7
    %v2204 = vsub.s32 %v2201, %v2203
    %v2205 = vrot.slane %v2191, %v2204
    %v2206 = vcombine.low %v2182, %v2198
    %v2207 = vcombine.high %v2182, %v2198
    %v2208 = vcombine.low %v2189, %v2205
    %v2209 = vcombine.high %v2189, %v2205
    %v2210 = vcombine.low %v1842, %v1849
    %v2212 = vunpack.c.l.s4 1983009808
    %v2213 = vunpack.c.0.s8 %v2212
    %v2214 = vlaneseq
    %v2215 = vshrl.u32 %v2214, 7
    %v2216 = vsub.s32 %v2213, %v2215
    %v2217 = vrot.slane %v2210, %v2216
    %v2218 = vcombine.low %v1866, %v1867
    %v2220 = vunpack.c.l.s4 1983009808
    %v2221 = vunpack.c.0.s8 %v2220
    %v2222 = vlaneseq
    %v2223 = vshrl.u32 %v2222, 7
    %v2224 = vsub.s32 %v2221, %v2223
    %v2225 = vrot.slane %v2218, %v2224
    %v2226 = vcombine.low %v1858, %v1865
    %v2228 = vunpack.c.l.s4 1983009808
    %v2229 = vunpack.c.0.s8 %v2228
    %v2230 = vlaneseq
    %v2231 = vshrl.u32 %v2230, 7
    %v2232 = vsub.s32 %v2229, %v2231
    %v2233 = vrot.slane %v2226, %v2232
    %v2234 = vcombine.low %v1868, %v1869
    %v2236 = vunpack.c.l.s4 1983009808
    %v2237 = vunpack.c.0.s8 %v2236
    %v2238 = vlaneseq
    %v2239 = vshrl.u32 %v2238, 7
    %v2240 = vsub.s32 %v2237, %v2239
    %v2241 = vrot.slane %v2234, %v2240
    %v2242 = vcombine.low %v2217, %v2225
    %v2243 = vcombine.high %v2217, %v2225
    %v2245 = vunpack.c.l.s4 1934713408
    %v2246 = vunpack.c.0.s8 %v2245
    %v2247 = vlaneseq
    %v2248 = vshrl.u32 %v2247, 7
    %v2249 = vsub.s32 %v2246, %v2248
    %v2250 = vrot.slane %v2242, %v2249
    %v2252 = vunpack.c.l.s4 1934713408
    %v2253 = vunpack.c.0.s8 %v2252
    %v2254 = vlaneseq
    %v2255 = vshrl.u32 %v2254, 7
    %v2256 = vsub.s32 %v2253, %v2255
    %v2257 = vrot.slane %v2243, %v2256
    %v2258 = vcombine.low %v2233, %v2241
    %v2259 = vcombine.high %v2233, %v2241
    %v2261 = vunpack.c.l.s4 1934713408
    %v2262 = vunpack.c.0.s8 %v2261
    %v2263 = vlaneseq
    %v2264 = vshrl.u32 %v2263, 7
    %v2265 = vsub.s32 %v2262, %v2264
    %v2266 = vrot.slane %v2258, %v2265
    %v2268 = vunpack.c.l.s4 1934713408
    %v2269 = vunpack.c.0.s8 %v2268
    %v2270 = vlaneseq
    %v2271 = vshrl.u32 %v2270, 7
    %v2272 = vsub.s32 %v2269, %v2271
    %v2273 = vrot.slane %v2259, %v2272
    %v2274 = vcombine.low %v2250, %v2266
    %v2275 = vcombine.high %v2250, %v2266
    %v2276 = vcombine.low %v2257, %v2273
    %v2277 = vcombine.high %v2257, %v2273
    %v2278 = vcombine.low %v1910, %v1917
    %v2280 = vunpack.c.l.s4 1983009808
    %v2281 = vunpack.c.0.s8 %v2280
    %v2282 = vlaneseq
    %v2283 = vshrl.u32 %v2282, 7
    %v2284 = vsub.s32 %v2281, %v2283
    %v2285 = vrot.slane %v2278, %v2284
    %v2286 = vcombine.low %v1934, %v1935
    %v2288 = vunpack.c.l.s4 1983009808
    %v2289 = vunpack.c.0.s8 %v2288
    %v2290 = vlaneseq
    %v2291 = vshrl.u32 %v2290, 7
    %v2292 = vsub.s32 %v2289, %v2291
    %v2293 = vrot.slane %v2286, %v2292
    %v2294 = vcombine.low %v1926, %v1933
    %v2296 = vunpack.c.l.s4 1983009808
    %v2297 = vunpack.c.0.s8 %v2296
    %v2298 = vlaneseq
    %v2299 = vshrl.u32 %v2298, 7
    %v2300 = vsub.s32 %v2297, %v2299
    %v2301 = vrot.slane %v2294, %v2300
    %v2302 = vcombine.low %v1936, %v1937
    %v2304 = vunpack.c.l.s4 1983009808
    %v2305 = vunpack.c.0.s8 %v2304
    %v2306 = vlaneseq
    %v2307 = vshrl.u32 %v2306, 7
    %v2308 = vsub.s32 %v2305, %v2307
    %v2309 = vrot.slane %v2302, %v2308
    %v2310 = vcombine.low %v2285, %v2293
    %v2311 = vcombine.high %v2285, %v2293
    %v2313 = vunpack.c.l.s4 1934713408
    %v2314 = vunpack.c.0.s8 %v2313
    %v2315 = vlaneseq
    %v2316 = vshrl.u32 %v2315, 7
    %v2317 = vsub.s32 %v2314, %v2316
    %v2318 = vrot.slane %v2310, %v2317
    %v2320 = vunpack.c.l.s4 1934713408
    %v2321 = vunpack.c.0.s8 %v2320
    %v2322 = vlaneseq
    %v2323 = vshrl.u32 %v2322, 7
    %v2324 = vsub.s32 %v2321, %v2323
    %v2325 = vrot.slane %v2311, %v2324
    %v2326 = vcombine.low %v2301, %v2309
    %v2327 = vcombine.high %v2301, %v2309
    %v2329 = vunpack.c.l.s4 1934713408
    %v2330 = vunpack.c.0.s8 %v2329
    %v2331 = vlaneseq
    %v2332 = vshrl.u32 %v2331, 7
    %v2333 = vsub.s32 %v2330, %v2332
    %v2334 = vrot.slane %v2326, %v2333
    %v2336 = vunpack.c.l.s4 1934713408
    %v2337 = vunpack.c.0.s8 %v2336
    %v2338 = vlaneseq
    %v2339 = vshrl.u32 %v2338, 7
    %v2340 = vsub.s32 %v2337, %v2339
    %v2341 = vrot.slane %v2327, %v2340
    %v2342 = vcombine.low %v2318, %v2334
    %v2343 = vcombine.high %v2318, %v2334
    %v2344 = vcombine.low %v2325, %v2341
    %v2345 = vcombine.high %v2325, %v2341
    %v2346 = vcombine.low %v1978, %v1985
    %v2348 = vunpack.c.l.s4 1983009808
    %v2349 = vunpack.c.0.s8 %v2348
    %v2350 = vlaneseq
    %v2351 = vshrl.u32 %v2350, 7
    %v2352 = vsub.s32 %v2349, %v2351
    %v2353 = vrot.slane %v2346, %v2352
    %v2354 = vcombine.low %v2002, %v2003
    %v2356 = vunpack.c.l.s4 1983009808
    %v2357 = vunpack.c.0.s8 %v2356
    %v2358 = vlaneseq
    %v2359 = vshrl.u32 %v2358, 7
    %v2360 = vsub.s32 %v2357, %v2359
    %v2361 = vrot.slane %v2354, %v2360
    %v2362 = vcombine.low %v1994, %v2001
    %v2364 = vunpack.c.l.s4 1983009808
    %v2365 = vunpack.c.0.s8 %v2364
    %v2366 = vlaneseq
    %v2367 = vshrl.u32 %v2366, 7
    %v2368 = vsub.s32 %v2365, %v2367
    %v2369 = vrot.slane %v2362, %v2368
    %v2370 = vcombine.low %v2004, %v2005
    %v2372 = vunpack.c.l.s4 1983009808
    %v2373 = vunpack.c.0.s8 %v2372
    %v2374 = vlaneseq
    %v2375 = vshrl.u32 %v2374, 7
    %v2376 = vsub.s32 %v2373, %v2375
    %v2377 = vrot.slane %v2370, %v2376
    %v2378 = vcombine.low %v2353, %v2361
    %v2379 = vcombine.high %v2353, %v2361
    %v2381 = vunpack.c.l.s4 1934713408
    %v2382 = vunpack.c.0.s8 %v2381
    %v2383 = vlaneseq
    %v2384 = vshrl.u32 %v2383, 7
    %v2385 = vsub.s32 %v2382, %v2384
    %v2386 = vrot.slane %v2378, %v2385
    %v2388 = vunpack.c.l.s4 1934713408
    %v2389 = vunpack.c.0.s8 %v2388
    %v2390 = vlaneseq
    %v2391 = vshrl.u32 %v2390, 7
    %v2392 = vsub.s32 %v2389, %v2391
    %v2393 = vrot.slane %v2379, %v2392
    %v2394 = vcombine.low %v2369, %v2377
    %v2395 = vcombine.high %v2369, %v2377
    %v2397 = vunpack.c.l.s4 1934713408
    %v2398 = vunpack.c.0.s8 %v2397
    %v2399 = vlaneseq
    %v2400 = vshrl.u32 %v2399, 7
    %v2401 = vsub.s32 %v2398, %v2400
    %v2402 = vrot.slane %v2394, %v2401
    %v2404 = vunpack.c.l.s4 1934713408
    %v2405 = vunpack.c.0.s8 %v2404
    %v2406 = vlaneseq
    %v2407 = vshrl.u32 %v2406, 7
    %v2408 = vsub.s32 %v2405, %v2407
    %v2409 = vrot.slane %v2395, %v2408
    %v2410 = vcombine.low %v2386, %v2402
    %v2411 = vcombine.high %v2386, %v2402
    %v2412 = vcombine.low %v2393, %v2409
    %v2413 = vcombine.high %v2393, %v2409
    %v2414 = vcombine.low %v2046, %v2053
    %v2416 = vunpack.c.l.s4 1983009808
    %v2417 = vunpack.c.0.s8 %v2416
    %v2418 = vlaneseq
    %v2419 = vshrl.u32 %v2418, 7
    %v2420 = vsub.s32 %v2417, %v2419
    %v2421 = vrot.slane %v2414, %v2420
    %v2422 = vcombine.low %v2070, %v2071
    %v2424 = vunpack.c.l.s4 1983009808
    %v2425 = vunpack.c.0.s8 %v2424
    %v2426 = vlaneseq
    %v2427 = vshrl.u32 %v2426, 7
    %v2428 = vsub.s32 %v2425, %v2427
    %v2429 = vrot.slane %v2422, %v2428
    %v2430 = vcombine.low %v2062, %v2069
    %v2432 = vunpack.c.l.s4 1983009808
    %v2433 = vunpack.c.0.s8 %v2432
    %v2434 = vlaneseq
    %v2435 = vshrl.u32 %v2434, 7
    %v2436 = vsub.s32 %v2433, %v2435
    %v2437 = vrot.slane %v2430, %v2436
    %v2438 = vcombine.low %v2072, %v2073
    %v2440 = vunpack.c.l.s4 1983009808
    %v2441 = vunpack.c.0.s8 %v2440
    %v2442 = vlaneseq
    %v2443 = vshrl.u32 %v2442, 7
    %v2444 = vsub.s32 %v2441, %v2443
    %v2445 = vrot.slane %v2438, %v2444
    %v2446 = vcombine.low %v2421, %v2429
    %v2447 = vcombine.high %v2421, %v2429
    %v2449 = vunpack.c.l.s4 1934713408
    %v2450 = vunpack.c.0.s8 %v2449
    %v2451 = vlaneseq
    %v2452 = vshrl.u32 %v2451, 7
    %v2453 = vsub.s32 %v2450, %v2452
    %v2454 = vrot.slane %v2446, %v2453
    %v2456 = vunpack.c.l.s4 1934713408
    %v2457 = vunpack.c.0.s8 %v2456
    %v2458 = vlaneseq
    %v2459 = vshrl.u32 %v2458, 7
    %v2460 = vsub.s32 %v2457, %v2459
    %v2461 = vrot.slane %v2447, %v2460
    %v2462 = vcombine.low %v2437, %v2445
    %v2463 = vcombine.high %v2437, %v2445
    %v2465 = vunpack.c.l.s4 1934713408
    %v2466 = vunpack.c.0.s8 %v2465
    %v2467 = vlaneseq
    %v2468 = vshrl.u32 %v2467, 7
    %v2469 = vsub.s32 %v2466, %v2468
    %v2470 = vrot.slane %v2462, %v2469
    %v2472 = vunpack.c.l.s4 1934713408
    %v2473 = vunpack.c.0.s8 %v2472
    %v2474 = vlaneseq
    %v2475 = vshrl.u32 %v2474, 7
    %v2476 = vsub.s32 %v2473, %v2475
    %v2477 = vrot.slane %v2463, %v2476
    %v2478 = vcombine.low %v2454, %v2470
    %v2479 = vcombine.high %v2454, %v2470
    %v2480 = vcombine.low %v2461, %v2477
    %v2481 = vcombine.high %v2461, %v2477
    %v2482 = vpack.c.bf16 %v2206, %v2138
    %v2483 = vpack.c.bf16 %v2342, %v2274
    %v2484 = vpack.c.bf16 %v2478, %v2410
    %v2485 = vpack.c.bf16 %v2207, %v2139
    %v2486 = vpack.c.bf16 %v2343, %v2275
    %v2487 = vpack.c.bf16 %v2479, %v2411
    %v2488 = vpack.c.bf16 %v2208, %v2140
    %v2489 = vpack.c.bf16 %v2344, %v2276
    %v2490 = vpack.c.bf16 %v2480, %v2412
    %v2491 = vpack.c.bf16 %v2209, %v2141
    %v2492 = vpack.c.bf16 %v2345, %v2277
    %v2493 = vpack.c.bf16 %v2481, %v2413
    %v2494 = vld [vmem:[%s5] sm:$0xff]
    %v2495 = vld [vmem:[%s5 + $0x8] sm:$0xff]
    %vm2496 = vcmask 64512
    %v2498 = vsel %vm2496, %v620, 0
    %v2501 = vsel %vm2496, %v1554, 0
    %v2504 = vsel %vm2496, %v1555, 0
    %v2507 = vsel %vm2496, %v1556, 0
    %2509 = vmatprep.subr.bf16.mxu0 0
    %2510 = vmatpush1.bf16.xpose.msra.mxu0 %v2501
    %2511 = vmatprep.subr.bf16.mxu0 0
    %2512 = vmatpush1.bf16.xpose.msra.mxu0 %v2504
    %2513 = vmatprep.subr.bf16.mxu0 0
    %2514 = vmatpush1.bf16.xpose.msra.mxu0 %v2507
    %2515 = vmatprep.subr.bf16.mxu0 0
    %2516 = vmatpush1.bf16.xpose.msra.mxu0 0
    %2517 = vmatprep.subr.bf16.mxu0 0
    %2518 = vmatpush1.bf16.xpose.msra.mxu0 0
    %2519 = vmatprep.subr.bf16.mxu0 0
    %2520 = vmatpush1.bf16.xpose.msra.mxu0 0
    %2521 = vmatprep.subr.bf16.mxu0 0
    %2522 = vmatpush1.bf16.xpose.msra.mxu0 0
    %2523 = vmatprep.subr.bf16.mxu0 0
    %2524 = vmatpush1.bf16.xpose.msra.mxu0 0
    %2525 = vmatprep.subr.bf16.mxu0 0
    %2526 = vmatpush1.bf16.xpose.msra.mxu0 0
    %2527 = vmatprep.subr.bf16.mxu0 0
    %2528 = vmatpush1.bf16.xpose.msra.mxu0 0
    %2529 = vmatprep.subr.bf16.mxu0 0
    %2530 = vmatpush1.bf16.xpose.msra.mxu0 0
    %2531 = vmatprep.subr.bf16.mxu0 0
    %2532 = vmatpush1.bf16.xpose.msra.mxu0 0
    %2533 = vmatprep.subr.bf16.mxu0 0
    %2534 = vmatpush1.bf16.xpose.msra.mxu0 0
    %2535 = vmatprep.subr.bf16.mxu0 0
    %2536 = vmatpush1.bf16.xpose.msra.mxu0 0
    %2537 = vmatprep.subr.bf16.mxu0 0
    %2538 = vmatpush1.bf16.xpose.msra.mxu0 0
    %2539 = vmatprep.subr.bf16.mxu0 0
    %2540 = vmatpush1.bf16.xpose.msra.mxu0 0
    %2541 = vmatprep.mubr.bf16.mxu0 0
    %2542 = vmatmul.mubr.bf16.gmra.mrb[0].mxu0 %v2498
    %v2543 = vpop.f32.mrb[0].mxu0
    %v2544 = vadd.f32 %v2494, %v2543
    %v2545 = vpop.f32.mrb[0].mxu0
    %v2546 = vpop.f32.mrb[0].mxu0
    %v2547 = vadd.f32 %v2495, %v2546
    %v2548 = vpop.f32.mrb[0].mxu0
    %2549 = vdwg.mxu0
    %v2551 = vsel %vm2496, %v621, 0
    %v2554 = vsel %vm2496, %v1557, 0
    %v2557 = vsel %vm2496, %v1558, 0
    %v2560 = vsel %vm2496, %v1559, 0
    %2562 = vmatprep.subr.bf16.mxu0 0
    %2563 = vmatpush1.bf16.xpose.msra.mxu0 %v2554
    %2564 = vmatprep.subr.bf16.mxu0 0
    %2565 = vmatpush1.bf16.xpose.msra.mxu0 %v2557
    %2566 = vmatprep.subr.bf16.mxu0 0
    %2567 = vmatpush1.bf16.xpose.msra.mxu0 %v2560
    %2568 = vmatprep.subr.bf16.mxu0 0
    %2569 = vmatpush1.bf16.xpose.msra.mxu0 0
    %2570 = vmatprep.subr.bf16.mxu0 0
    %2571 = vmatpush1.bf16.xpose.msra.mxu0 0
    %2572 = vmatprep.subr.bf16.mxu0 0
    %2573 = vmatpush1.bf16.xpose.msra.mxu0 0
    %2574 = vmatprep.subr.bf16.mxu0 0
    %2575 = vmatpush1.bf16.xpose.msra.mxu0 0
    %2576 = vmatprep.subr.bf16.mxu0 0
    %2577 = vmatpush1.bf16.xpose.msra.mxu0 0
    %2578 = vmatprep.subr.bf16.mxu0 0
    %2579 = vmatpush1.bf16.xpose.msra.mxu0 0
    %2580 = vmatprep.subr.bf16.mxu0 0
    %2581 = vmatpush1.bf16.xpose.msra.mxu0 0
    %2582 = vmatprep.subr.bf16.mxu0 0
    %2583 = vmatpush1.bf16.xpose.msra.mxu0 0
    %2584 = vmatprep.subr.bf16.mxu0 0
    %2585 = vmatpush1.bf16.xpose.msra.mxu0 0
    %2586 = vmatprep.subr.bf16.mxu0 0
    %2587 = vmatpush1.bf16.xpose.msra.mxu0 0
    %2588 = vmatprep.subr.bf16.mxu0 0
    %2589 = vmatpush1.bf16.xpose.msra.mxu0 0
    %2590 = vmatprep.subr.bf16.mxu0 0
    %2591 = vmatpush1.bf16.xpose.msra.mxu0 0
    %2592 = vmatprep.subr.bf16.mxu0 0
    %2593 = vmatpush1.bf16.xpose.msra.mxu0 0
    %2594 = vmatprep.mubr.bf16.mxu0 0
    %2595 = vmatmul.mubr.bf16.gmra.mrb[0].mxu0 %v2551
    %v2596 = vpop.f32.mrb[0].mxu0
    %v2597 = vadd.f32 %v2494, %v2596
    %v2598 = vpop.f32.mrb[0].mxu0
    %v2599 = vpop.f32.mrb[0].mxu0
    %v2600 = vadd.f32 %v2495, %v2599
    %v2601 = vpop.f32.mrb[0].mxu0
    %2602 = vdwg.mxu0
    %v2604 = vsel %vm2496, %v622, 0
    %v2607 = vsel %vm2496, %v1560, 0
    %v2610 = vsel %vm2496, %v1561, 0
    %v2613 = vsel %vm2496, %v1562, 0
    %2615 = vmatprep.subr.bf16.mxu0 0
    %2616 = vmatpush1.bf16.xpose.msra.mxu0 %v2607
    %2617 = vmatprep.subr.bf16.mxu0 0
    %2618 = vmatpush1.bf16.xpose.msra.mxu0 %v2610
    %2619 = vmatprep.subr.bf16.mxu0 0
    %2620 = vmatpush1.bf16.xpose.msra.mxu0 %v2613
    %2621 = vmatprep.subr.bf16.mxu0 0
    %2622 = vmatpush1.bf16.xpose.msra.mxu0 0
    %2623 = vmatprep.subr.bf16.mxu0 0
    %2624 = vmatpush1.bf16.xpose.msra.mxu0 0
    %2625 = vmatprep.subr.bf16.mxu0 0
    %2626 = vmatpush1.bf16.xpose.msra.mxu0 0
    %2627 = vmatprep.subr.bf16.mxu0 0
    %2628 = vmatpush1.bf16.xpose.msra.mxu0 0
    %2629 = vmatprep.subr.bf16.mxu0 0
    %2630 = vmatpush1.bf16.xpose.msra.mxu0 0
    %2631 = vmatprep.subr.bf16.mxu0 0
    %2632 = vmatpush1.bf16.xpose.msra.mxu0 0
    %2633 = vmatprep.subr.bf16.mxu0 0
    %2634 = vmatpush1.bf16.xpose.msra.mxu0 0
    %2635 = vmatprep.subr.bf16.mxu0 0
    %2636 = vmatpush1.bf16.xpose.msra.mxu0 0
    %2637 = vmatprep.subr.bf16.mxu0 0
    %2638 = vmatpush1.bf16.xpose.msra.mxu0 0
    %2639 = vmatprep.subr.bf16.mxu0 0
    %2640 = vmatpush1.bf16.xpose.msra.mxu0 0
    %2641 = vmatprep.subr.bf16.mxu0 0
    %2642 = vmatpush1.bf16.xpose.msra.mxu0 0
    %2643 = vmatprep.subr.bf16.mxu0 0
    %2644 = vmatpush1.bf16.xpose.msra.mxu0 0
    %2645 = vmatprep.subr.bf16.mxu0 0
    %2646 = vmatpush1.bf16.xpose.msra.mxu0 0
    %2647 = vmatprep.mubr.bf16.mxu0 0
    %2648 = vmatmul.mubr.bf16.gmra.mrb[0].mxu0 %v2604
    %v2649 = vpop.f32.mrb[0].mxu0
    %v2650 = vadd.f32 %v2494, %v2649
    %v2651 = vpop.f32.mrb[0].mxu0
    %v2652 = vpop.f32.mrb[0].mxu0
    %v2653 = vadd.f32 %v2495, %v2652
    %v2654 = vpop.f32.mrb[0].mxu0
    %2655 = vdwg.mxu0
    %v2657 = vsel %vm2496, %v623, 0
    %v2660 = vsel %vm2496, %v1563, 0
    %v2663 = vsel %vm2496, %v1564, 0
    %v2666 = vsel %vm2496, %v1565, 0
    %2668 = vmatprep.subr.bf16.mxu0 0
    %2669 = vmatpush1.bf16.xpose.msra.mxu0 %v2660
    %2670 = vmatprep.subr.bf16.mxu0 0
    %2671 = vmatpush1.bf16.xpose.msra.mxu0 %v2663
    %2672 = vmatprep.subr.bf16.mxu0 0
    %2673 = vmatpush1.bf16.xpose.msra.mxu0 %v2666
    %2674 = vmatprep.subr.bf16.mxu0 0
    %2675 = vmatpush1.bf16.xpose.msra.mxu0 0
    %2676 = vmatprep.subr.bf16.mxu0 0
    %2677 = vmatpush1.bf16.xpose.msra.mxu0 0
    %2678 = vmatprep.subr.bf16.mxu0 0
    %2679 = vmatpush1.bf16.xpose.msra.mxu0 0
    %2680 = vmatprep.subr.bf16.mxu0 0
    %2681 = vmatpush1.bf16.xpose.msra.mxu0 0
    %2682 = vmatprep.subr.bf16.mxu0 0
    %2683 = vmatpush1.bf16.xpose.msra.mxu0 0
    %2684 = vmatprep.subr.bf16.mxu0 0
    %2685 = vmatpush1.bf16.xpose.msra.mxu0 0
    %2686 = vmatprep.subr.bf16.mxu0 0
    %2687 = vmatpush1.bf16.xpose.msra.mxu0 0
    %2688 = vmatprep.subr.bf16.mxu0 0
    %2689 = vmatpush1.bf16.xpose.msra.mxu0 0
    %2690 = vmatprep.subr.bf16.mxu0 0
    %2691 = vmatpush1.bf16.xpose.msra.mxu0 0
    %2692 = vmatprep.subr.bf16.mxu0 0
    %2693 = vmatpush1.bf16.xpose.msra.mxu0 0
    %2694 = vmatprep.subr.bf16.mxu0 0
    %2695 = vmatpush1.bf16.xpose.msra.mxu0 0
    %2696 = vmatprep.subr.bf16.mxu0 0
    %2697 = vmatpush1.bf16.xpose.msra.mxu0 0
    %2698 = vmatprep.subr.bf16.mxu0 0
    %2699 = vmatpush1.bf16.xpose.msra.mxu0 0
    %2700 = vmatprep.mubr.bf16.mxu0 0
    %2701 = vmatmul.mubr.bf16.gmra.mrb[0].mxu0 %v2657
    %v2702 = vpop.f32.mrb[0].mxu0
    %v2703 = vadd.f32 %v2494, %v2702
    %v2704 = vpop.f32.mrb[0].mxu0
    %v2705 = vpop.f32.mrb[0].mxu0
    %v2706 = vadd.f32 %v2495, %v2705
    %v2707 = vpop.f32.mrb[0].mxu0
    %2708 = vdwg.mxu0
    %vm2709 = vcmask 392192
    %v2710 = vsel %vm2709, %v2544, -inf
    %2711 = vmax.xlane.f32.xlu0 %v2710
    %v2712 = vpop.xlane.xlu0 %2711
    %v2713 = vsel %vm2709, %v2547, -inf
    %2714 = vmax.xlane.f32.xlu0 %v2713
    %v2715 = vpop.xlane.xlu0 %2714
    %v2716 = vsel %vm2709, %v2597, -inf
    %2717 = vmax.xlane.f32.xlu0 %v2716
    %v2718 = vpop.xlane.xlu0 %2717
    %v2719 = vsel %vm2709, %v2600, -inf
    %2720 = vmax.xlane.f32.xlu0 %v2719
    %v2721 = vpop.xlane.xlu0 %2720
    %v2722 = vsel %vm2709, %v2650, -inf
    %2723 = vmax.xlane.f32.xlu0 %v2722
    %v2724 = vpop.xlane.xlu0 %2723
    %v2725 = vsel %vm2709, %v2653, -inf
    %2726 = vmax.xlane.f32.xlu0 %v2725
    %v2727 = vpop.xlane.xlu0 %2726
    %v2728 = vsel %vm2709, %v2703, -inf
    %2729 = vmax.xlane.f32.xlu0 %v2728
    %v2730 = vpop.xlane.xlu0 %2729
    %v2731 = vsel %vm2709, %v2706, -inf
    %2732 = vmax.xlane.f32.xlu0 %v2731
    %v2733 = vpop.xlane.xlu0 %2732
    %v2734 = vsub.f32 %v2544, %v2712
    %v2735 = vsub.f32 %v2547, %v2715
    %v2736 = vsub.f32 %v2597, %v2718
    %v2737 = vsub.f32 %v2600, %v2721
    %v2738 = vsub.f32 %v2650, %v2724
    %v2739 = vsub.f32 %v2653, %v2727
    %v2740 = vsub.f32 %v2703, %v2730
    %v2741 = vsub.f32 %v2706, %v2733
    %v2742 = vmul.f32 %v2734, 1.442695
    %v2743 = vpow.pop %v2742
    %v2744 = vmul.f32 %v2735, 1.442695
    %v2745 = vpow.pop %v2744
    %v2746 = vmul.f32 %v2736, 1.442695
    %v2747 = vpow.pop %v2746
    %v2748 = vmul.f32 %v2737, 1.442695
    %v2749 = vpow.pop %v2748
    %v2750 = vmul.f32 %v2738, 1.442695
    %v2751 = vpow.pop %v2750
    %v2752 = vmul.f32 %v2739, 1.442695
    %v2753 = vpow.pop %v2752
    %v2754 = vmul.f32 %v2740, 1.442695
    %v2755 = vpow.pop %v2754
    %v2756 = vmul.f32 %v2741, 1.442695
    %v2757 = vpow.pop %v2756
    %v2758 = vsel %vm2709, %v2743, 0.0
    %2759 = vadd.xlane.f32.xlu0 %v2758
    %v2760 = vpop.xlane.xlu0 %2759
    %v2761 = vsel %vm2709, %v2745, 0.0
    %2762 = vadd.xlane.f32.xlu0 %v2761
    %v2763 = vpop.xlane.xlu0 %2762
    %v2764 = vsel %vm2709, %v2747, 0.0
    %2765 = vadd.xlane.f32.xlu0 %v2764
    %v2766 = vpop.xlane.xlu0 %2765
    %v2767 = vsel %vm2709, %v2749, 0.0
    %2768 = vadd.xlane.f32.xlu0 %v2767
    %v2769 = vpop.xlane.xlu0 %2768
    %v2770 = vsel %vm2709, %v2751, 0.0
    %2771 = vadd.xlane.f32.xlu0 %v2770
    %v2772 = vpop.xlane.xlu0 %2771
    %v2773 = vsel %vm2709, %v2753, 0.0
    %2774 = vadd.xlane.f32.xlu0 %v2773
    %v2775 = vpop.xlane.xlu0 %2774
    %v2776 = vsel %vm2709, %v2755, 0.0
    %2777 = vadd.xlane.f32.xlu0 %v2776
    %v2778 = vpop.xlane.xlu0 %2777
    %v2779 = vsel %vm2709, %v2757, 0.0
    %2780 = vadd.xlane.f32.xlu0 %v2779
    %v2781 = vpop.xlane.xlu0 %2780
    %v2782 = vrcp.pop %v2760
    %v2783 = vrcp.pop %v2763
    %v2784 = vrcp.pop %v2766
    %v2785 = vrcp.pop %v2769
    %v2786 = vrcp.pop %v2772
    %v2787 = vrcp.pop %v2775
    %v2788 = vrcp.pop %v2778
    %v2789 = vrcp.pop %v2781
    %v2790 = vmul.f32 %v2743, %v2782
    %v2791 = vmul.f32 %v2745, %v2783
    %v2792 = vmul.f32 %v2747, %v2784
    %v2793 = vmul.f32 %v2749, %v2785
    %v2794 = vmul.f32 %v2751, %v2786
    %v2795 = vmul.f32 %v2753, %v2787
    %v2796 = vmul.f32 %v2755, %v2788
    %v2797 = vmul.f32 %v2757, %v2789
    %v2798 = vpack.c.bf16 %v2791, %v2790
    %v2799 = vpack.c.bf16 %v2793, %v2792
    %v2800 = vpack.c.bf16 %v2795, %v2794
    %v2801 = vpack.c.bf16 %v2797, %v2796
    %v2803 = vsel %vm2709, %v2798, 0
    %2805 = vmatprep.subr.bf16.mxu0 0
    %2806 = vmatpush1.bf16.msra.mxu0 %v2482
    %2807 = vmatprep.subr.bf16.mxu0 0
    %2808 = vmatpush1.bf16.msra.mxu0 %v2483
    %2809 = vmatprep.subr.bf16.mxu0 0
    %2810 = vmatpush1.bf16.msra.mxu0 %v2484
    %2811 = vmatprep.subr.bf16.mxu0 0
    %2812 = vmatpush1.bf16.msra.mxu0 0
    %2813 = vmatprep.subr.bf16.mxu0 0
    %2814 = vmatpush1.bf16.msra.mxu0 0
    %2815 = vmatprep.subr.bf16.mxu0 0
    %2816 = vmatpush1.bf16.msra.mxu0 0
    %2817 = vmatprep.subr.bf16.mxu0 0
    %2818 = vmatpush1.bf16.msra.mxu0 0
    %2819 = vmatprep.subr.bf16.mxu0 0
    %2820 = vmatpush1.bf16.msra.mxu0 0
    %2821 = vmatprep.subr.bf16.mxu0 0
    %2822 = vmatpush1.bf16.msra.mxu0 0
    %2823 = vmatprep.subr.bf16.mxu0 0
    %2824 = vmatpush1.bf16.msra.mxu0 0
    %2825 = vmatprep.subr.bf16.mxu0 0
    %2826 = vmatpush1.bf16.msra.mxu0 0
    %2827 = vmatprep.subr.bf16.mxu0 0
    %2828 = vmatpush1.bf16.msra.mxu0 0
    %2829 = vmatprep.subr.bf16.mxu0 0
    %2830 = vmatpush1.bf16.msra.mxu0 0
    %2831 = vmatprep.subr.bf16.mxu0 0
    %2832 = vmatpush1.bf16.msra.mxu0 0
    %2833 = vmatprep.subr.bf16.mxu0 0
    %2834 = vmatpush1.bf16.msra.mxu0 0
    %2835 = vmatprep.subr.bf16.mxu0 0
    %2836 = vmatpush1.bf16.msra.mxu0 0
    %2837 = vmatprep.mubr.bf16.mxu0 0
    %2838 = vmatmul.mubr.bf16.gmra.mrb[0].mxu0 %v2803
    %v2839 = vpop.f32.mrb[0].mxu0
    %v2840 = vadd.f32 0.0, %v2839
    %v2841 = vpop.f32.mrb[0].mxu0
    %v2842 = vpop.f32.mrb[0].mxu0
    %v2843 = vadd.f32 0.0, %v2842
    %v2844 = vpop.f32.mrb[0].mxu0
    %2845 = vdwg.mxu0
    %v2847 = vsel %vm2709, %v2799, 0
    %2849 = vmatprep.subr.bf16.mxu0 0
    %2850 = vmatpush1.bf16.msra.mxu0 %v2485
    %2851 = vmatprep.subr.bf16.mxu0 0
    %2852 = vmatpush1.bf16.msra.mxu0 %v2486
    %2853 = vmatprep.subr.bf16.mxu0 0
    %2854 = vmatpush1.bf16.msra.mxu0 %v2487
    %2855 = vmatprep.subr.bf16.mxu0 0
    %2856 = vmatpush1.bf16.msra.mxu0 0
    %2857 = vmatprep.subr.bf16.mxu0 0
    %2858 = vmatpush1.bf16.msra.mxu0 0
    %2859 = vmatprep.subr.bf16.mxu0 0
    %2860 = vmatpush1.bf16.msra.mxu0 0
    %2861 = vmatprep.subr.bf16.mxu0 0
    %2862 = vmatpush1.bf16.msra.mxu0 0
    %2863 = vmatprep.subr.bf16.mxu0 0
    %2864 = vmatpush1.bf16.msra.mxu0 0
    %2865 = vmatprep.subr.bf16.mxu0 0
    %2866 = vmatpush1.bf16.msra.mxu0 0
    %2867 = vmatprep.subr.bf16.mxu0 0
    %2868 = vmatpush1.bf16.msra.mxu0 0
    %2869 = vmatprep.subr.bf16.mxu0 0
    %2870 = vmatpush1.bf16.msra.mxu0 0
    %2871 = vmatprep.subr.bf16.mxu0 0
    %2872 = vmatpush1.bf16.msra.mxu0 0
    %2873 = vmatprep.subr.bf16.mxu0 0
    %2874 = vmatpush1.bf16.msra.mxu0 0
    %2875 = vmatprep.subr.bf16.mxu0 0
    %2876 = vmatpush1.bf16.msra.mxu0 0
    %2877 = vmatprep.subr.bf16.mxu0 0
    %2878 = vmatpush1.bf16.msra.mxu0 0
    %2879 = vmatprep.subr.bf16.mxu0 0
    %2880 = vmatpush1.bf16.msra.mxu0 0
    %2881 = vmatprep.mubr.bf16.mxu0 0
    %2882 = vmatmul.mubr.bf16.gmra.mrb[0].mxu0 %v2847
    %v2883 = vpop.f32.mrb[0].mxu0
    %v2884 = vadd.f32 0.0, %v2883
    %v2885 = vpop.f32.mrb[0].mxu0
    %v2886 = vpop.f32.mrb[0].mxu0
    %v2887 = vadd.f32 0.0, %v2886
    %v2888 = vpop.f32.mrb[0].mxu0
    %2889 = vdwg.mxu0
    %v2891 = vsel %vm2709, %v2800, 0
    %2893 = vmatprep.subr.bf16.mxu0 0
    %2894 = vmatpush1.bf16.msra.mxu0 %v2488
    %2895 = vmatprep.subr.bf16.mxu0 0
    %2896 = vmatpush1.bf16.msra.mxu0 %v2489
    %2897 = vmatprep.subr.bf16.mxu0 0
    %2898 = vmatpush1.bf16.msra.mxu0 %v2490
    %2899 = vmatprep.subr.bf16.mxu0 0
    %2900 = vmatpush1.bf16.msra.mxu0 0
    %2901 = vmatprep.subr.bf16.mxu0 0
    %2902 = vmatpush1.bf16.msra.mxu0 0
    %2903 = vmatprep.subr.bf16.mxu0 0
    %2904 = vmatpush1.bf16.msra.mxu0 0
    %2905 = vmatprep.subr.bf16.mxu0 0
    %2906 = vmatpush1.bf16.msra.mxu0 0
    %2907 = vmatprep.subr.bf16.mxu0 0
    %2908 = vmatpush1.bf16.msra.mxu0 0
    %2909 = vmatprep.subr.bf16.mxu0 0
    %2910 = vmatpush1.bf16.msra.mxu0 0
    %2911 = vmatprep.subr.bf16.mxu0 0
    %2912 = vmatpush1.bf16.msra.mxu0 0
    %2913 = vmatprep.subr.bf16.mxu0 0
    %2914 = vmatpush1.bf16.msra.mxu0 0
    %2915 = vmatprep.subr.bf16.mxu0 0
    %2916 = vmatpush1.bf16.msra.mxu0 0
    %2917 = vmatprep.subr.bf16.mxu0 0
    %2918 = vmatpush1.bf16.msra.mxu0 0
    %2919 = vmatprep.subr.bf16.mxu0 0
    %2920 = vmatpush1.bf16.msra.mxu0 0
    %2921 = vmatprep.subr.bf16.mxu0 0
    %2922 = vmatpush1.bf16.msra.mxu0 0
    %2923 = vmatprep.subr.bf16.mxu0 0
    %2924 = vmatpush1.bf16.msra.mxu0 0
    %2925 = vmatprep.mubr.bf16.mxu0 0
    %2926 = vmatmul.mubr.bf16.gmra.mrb[0].mxu0 %v2891
    %v2927 = vpop.f32.mrb[0].mxu0
    %v2928 = vadd.f32 0.0, %v2927
    %v2929 = vpop.f32.mrb[0].mxu0
    %v2930 = vpop.f32.mrb[0].mxu0
    %v2931 = vadd.f32 0.0, %v2930
    %v2932 = vpop.f32.mrb[0].mxu0
    %2933 = vdwg.mxu0
    %v2935 = vsel %vm2709, %v2801, 0
    %2937 = vmatprep.subr.bf16.mxu0 0
    %2938 = vmatpush1.bf16.msra.mxu0 %v2491
    %2939 = vmatprep.subr.bf16.mxu0 0
    %2940 = vmatpush1.bf16.msra.mxu0 %v2492
    %2941 = vmatprep.subr.bf16.mxu0 0
    %2942 = vmatpush1.bf16.msra.mxu0 %v2493
    %2943 = vmatprep.subr.bf16.mxu0 0
    %2944 = vmatpush1.bf16.msra.mxu0 0
    %2945 = vmatprep.subr.bf16.mxu0 0
    %2946 = vmatpush1.bf16.msra.mxu0 0
    %2947 = vmatprep.subr.bf16.mxu0 0
    %2948 = vmatpush1.bf16.msra.mxu0 0
    %2949 = vmatprep.subr.bf16.mxu0 0
    %2950 = vmatpush1.bf16.msra.mxu0 0
    %2951 = vmatprep.subr.bf16.mxu0 0
    %2952 = vmatpush1.bf16.msra.mxu0 0
    %2953 = vmatprep.subr.bf16.mxu0 0
    %2954 = vmatpush1.bf16.msra.mxu0 0
    %2955 = vmatprep.subr.bf16.mxu0 0
    %2956 = vmatpush1.bf16.msra.mxu0 0
    %2957 = vmatprep.subr.bf16.mxu0 0
    %2958 = vmatpush1.bf16.msra.mxu0 0
    %2959 = vmatprep.subr.bf16.mxu0 0
    %2960 = vmatpush1.bf16.msra.mxu0 0
    %2961 = vmatprep.subr.bf16.mxu0 0
    %2962 = vmatpush1.bf16.msra.mxu0 0
    %2963 = vmatprep.subr.bf16.mxu0 0
    %2964 = vmatpush1.bf16.msra.mxu0 0
    %2965 = vmatprep.subr.bf16.mxu0 0
    %2966 = vmatpush1.bf16.msra.mxu0 0
    %2967 = vmatprep.subr.bf16.mxu0 0
    %2968 = vmatpush1.bf16.msra.mxu0 0
    %2969 = vmatprep.mubr.bf16.mxu0 0
    %2970 = vmatmul.mubr.bf16.gmra.mrb[0].mxu0 %v2935
    %v2971 = vpop.f32.mrb[0].mxu0
    %v2972 = vadd.f32 0.0, %v2971
    %v2973 = vpop.f32.mrb[0].mxu0
    %v2974 = vpop.f32.mrb[0].mxu0
    %v2975 = vadd.f32 0.0, %v2974
    %v2976 = vpop.f32.mrb[0].mxu0
    %2977 = vdwg.mxu0
    %v2978 = vcombine.low %v2840, %v2928
    %v2979 = vcombine.high %v2840, %v2928
    %v2981 = vunpack.c.l.s4 1983009808
    %v2982 = vunpack.c.0.s8 %v2981
    %v2983 = vlaneseq
    %v2984 = vshrl.u32 %v2983, 7
    %v2985 = vsub.s32 %v2982, %v2984
    %v2986 = vrot.slane %v2978, %v2985
    %v2988 = vunpack.c.l.s4 1983009808
    %v2989 = vunpack.c.0.s8 %v2988
    %v2990 = vlaneseq
    %v2991 = vshrl.u32 %v2990, 7
    %v2992 = vsub.s32 %v2989, %v2991
    %v2993 = vrot.slane %v2979, %v2992
    %v2994 = vcombine.low %v2884, %v2972
    %v2995 = vcombine.high %v2884, %v2972
    %v2997 = vunpack.c.l.s4 1983009808
    %v2998 = vunpack.c.0.s8 %v2997
    %v2999 = vlaneseq
    %v3000 = vshrl.u32 %v2999, 7
    %v3001 = vsub.s32 %v2998, %v3000
    %v3002 = vrot.slane %v2994, %v3001
    %v3004 = vunpack.c.l.s4 1983009808
    %v3005 = vunpack.c.0.s8 %v3004
    %v3006 = vlaneseq
    %v3007 = vshrl.u32 %v3006, 7
    %v3008 = vsub.s32 %v3005, %v3007
    %v3009 = vrot.slane %v2995, %v3008
    %v3010 = vcombine.low %v2986, %v3002
    %v3011 = vcombine.high %v2986, %v3002
    %v3013 = vunpack.c.l.s4 1934713408
    %v3014 = vunpack.c.0.s8 %v3013
    %v3015 = vlaneseq
    %v3016 = vshrl.u32 %v3015, 7
    %v3017 = vsub.s32 %v3014, %v3016
    %v3018 = vrot.slane %v3010, %v3017
    %v3020 = vunpack.c.l.s4 1934713408
    %v3021 = vunpack.c.0.s8 %v3020
    %v3022 = vlaneseq
    %v3023 = vshrl.u32 %v3022, 7
    %v3024 = vsub.s32 %v3021, %v3023
    %v3025 = vrot.slane %v3011, %v3024
    %v3026 = vcombine.low %v2993, %v3009
    %v3027 = vcombine.high %v2993, %v3009
    %v3029 = vunpack.c.l.s4 1934713408
    %v3030 = vunpack.c.0.s8 %v3029
    %v3031 = vlaneseq
    %v3032 = vshrl.u32 %v3031, 7
    %v3033 = vsub.s32 %v3030, %v3032
    %v3034 = vrot.slane %v3026, %v3033
    %v3036 = vunpack.c.l.s4 1934713408
    %v3037 = vunpack.c.0.s8 %v3036
    %v3038 = vlaneseq
    %v3039 = vshrl.u32 %v3038, 7
    %v3040 = vsub.s32 %v3037, %v3039
    %v3041 = vrot.slane %v3027, %v3040
    %v3042 = vcombine.high %v3018, 0.0
    %v3043 = vcombine.high %v3025, 0.0
    %v3044 = vcombine.high %v3034, 0.0
    %v3045 = vcombine.high %v3041, 0.0
    %v3046 = vcombine.low %v2843, %v2931
    %v3047 = vcombine.high %v2843, %v2931
    %v3049 = vunpack.c.l.s4 1983009808
    %v3050 = vunpack.c.0.s8 %v3049
    %v3051 = vlaneseq
    %v3052 = vshrl.u32 %v3051, 7
    %v3053 = vsub.s32 %v3050, %v3052
    %v3054 = vrot.slane %v3046, %v3053
    %v3056 = vunpack.c.l.s4 1983009808
    %v3057 = vunpack.c.0.s8 %v3056
    %v3058 = vlaneseq
    %v3059 = vshrl.u32 %v3058, 7
    %v3060 = vsub.s32 %v3057, %v3059
    %v3061 = vrot.slane %v3047, %v3060
    %v3062 = vcombine.low %v2887, %v2975
    %v3063 = vcombine.high %v2887, %v2975
    %v3065 = vunpack.c.l.s4 1983009808
    %v3066 = vunpack.c.0.s8 %v3065
    %v3067 = vlaneseq
    %v3068 = vshrl.u32 %v3067, 7
    %v3069 = vsub.s32 %v3066, %v3068
    %v3070 = vrot.slane %v3062, %v3069
    %v3072 = vunpack.c.l.s4 1983009808
    %v3073 = vunpack.c.0.s8 %v3072
    %v3074 = vlaneseq
    %v3075 = vshrl.u32 %v3074, 7
    %v3076 = vsub.s32 %v3073, %v3075
    %v3077 = vrot.slane %v3063, %v3076
    %v3078 = vcombine.low %v3054, %v3070
    %v3079 = vcombine.high %v3054, %v3070
    %v3081 = vunpack.c.l.s4 1934713408
    %v3082 = vunpack.c.0.s8 %v3081
    %v3083 = vlaneseq
    %v3084 = vshrl.u32 %v3083, 7
    %v3085 = vsub.s32 %v3082, %v3084
    %v3086 = vrot.slane %v3078, %v3085
    %v3088 = vunpack.c.l.s4 1934713408
    %v3089 = vunpack.c.0.s8 %v3088
    %v3090 = vlaneseq
    %v3091 = vshrl.u32 %v3090, 7
    %v3092 = vsub.s32 %v3089, %v3091
    %v3093 = vrot.slane %v3079, %v3092
    %v3094 = vcombine.low %v3061, %v3077
    %v3095 = vcombine.high %v3061, %v3077
    %v3097 = vunpack.c.l.s4 1934713408
    %v3098 = vunpack.c.0.s8 %v3097
    %v3099 = vlaneseq
    %v3100 = vshrl.u32 %v3099, 7
    %v3101 = vsub.s32 %v3098, %v3100
    %v3102 = vrot.slane %v3094, %v3101
    %v3104 = vunpack.c.l.s4 1934713408
    %v3105 = vunpack.c.0.s8 %v3104
    %v3106 = vlaneseq
    %v3107 = vshrl.u32 %v3106, 7
    %v3108 = vsub.s32 %v3105, %v3107
    %v3109 = vrot.slane %v3095, %v3108
    %v3110 = vcombine.high %v3086, 0.0
    %v3111 = vcombine.high %v3093, 0.0
    %v3112 = vcombine.high %v3102, 0.0
    %v3113 = vcombine.high %v3109, 0.0
    %v3114 = vcombine.low %v3018, %v3025
    %v3116 = vunpack.c.l.s4 1983009808
    %v3117 = vunpack.c.0.s8 %v3116
    %v3118 = vlaneseq
    %v3119 = vshrl.u32 %v3118, 7
    %v3120 = vsub.s32 %v3117, %v3119
    %v3121 = vrot.slane %v3114, %v3120
    %v3122 = vcombine.low %v3042, %v3043
    %v3124 = vunpack.c.l.s4 1983009808
    %v3125 = vunpack.c.0.s8 %v3124
    %v3126 = vlaneseq
    %v3127 = vshrl.u32 %v3126, 7
    %v3128 = vsub.s32 %v3125, %v3127
    %v3129 = vrot.slane %v3122, %v3128
    %v3130 = vcombine.low %v3034, %v3041
    %v3132 = vunpack.c.l.s4 1983009808
    %v3133 = vunpack.c.0.s8 %v3132
    %v3134 = vlaneseq
    %v3135 = vshrl.u32 %v3134, 7
    %v3136 = vsub.s32 %v3133, %v3135
    %v3137 = vrot.slane %v3130, %v3136
    %v3138 = vcombine.low %v3044, %v3045
    %v3140 = vunpack.c.l.s4 1983009808
    %v3141 = vunpack.c.0.s8 %v3140
    %v3142 = vlaneseq
    %v3143 = vshrl.u32 %v3142, 7
    %v3144 = vsub.s32 %v3141, %v3143
    %v3145 = vrot.slane %v3138, %v3144
    %v3146 = vcombine.low %v3121, %v3129
    %v3147 = vcombine.high %v3121, %v3129
    %v3149 = vunpack.c.l.s4 1934713408
    %v3150 = vunpack.c.0.s8 %v3149
    %v3151 = vlaneseq
    %v3152 = vshrl.u32 %v3151, 7
    %v3153 = vsub.s32 %v3150, %v3152
    %v3154 = vrot.slane %v3146, %v3153
    %v3156 = vunpack.c.l.s4 1934713408
    %v3157 = vunpack.c.0.s8 %v3156
    %v3158 = vlaneseq
    %v3159 = vshrl.u32 %v3158, 7
    %v3160 = vsub.s32 %v3157, %v3159
    %v3161 = vrot.slane %v3147, %v3160
    %v3162 = vcombine.low %v3137, %v3145
    %v3163 = vcombine.high %v3137, %v3145
    %v3165 = vunpack.c.l.s4 1934713408
    %v3166 = vunpack.c.0.s8 %v3165
    %v3167 = vlaneseq
    %v3168 = vshrl.u32 %v3167, 7
    %v3169 = vsub.s32 %v3166, %v3168
    %v3170 = vrot.slane %v3162, %v3169
    %v3172 = vunpack.c.l.s4 1934713408
    %v3173 = vunpack.c.0.s8 %v3172
    %v3174 = vlaneseq
    %v3175 = vshrl.u32 %v3174, 7
    %v3176 = vsub.s32 %v3173, %v3175
    %v3177 = vrot.slane %v3163, %v3176
    %v3178 = vcombine.low %v3154, %v3170
    %v3179 = vcombine.high %v3154, %v3170
    %v3180 = vcombine.low %v3161, %v3177
    %v3181 = vcombine.high %v3161, %v3177
    %v3182 = vcombine.low %v3086, %v3093
    %v3184 = vunpack.c.l.s4 1983009808
    %v3185 = vunpack.c.0.s8 %v3184
    %v3186 = vlaneseq
    %v3187 = vshrl.u32 %v3186, 7
    %v3188 = vsub.s32 %v3185, %v3187
    %v3189 = vrot.slane %v3182, %v3188
    %v3190 = vcombine.low %v3110, %v3111
    %v3192 = vunpack.c.l.s4 1983009808
    %v3193 = vunpack.c.0.s8 %v3192
    %v3194 = vlaneseq
    %v3195 = vshrl.u32 %v3194, 7
    %v3196 = vsub.s32 %v3193, %v3195
    %v3197 = vrot.slane %v3190, %v3196
    %v3198 = vcombine.low %v3102, %v3109
    %v3200 = vunpack.c.l.s4 1983009808
    %v3201 = vunpack.c.0.s8 %v3200
    %v3202 = vlaneseq
    %v3203 = vshrl.u32 %v3202, 7
    %v3204 = vsub.s32 %v3201, %v3203
    %v3205 = vrot.slane %v3198, %v3204
    %v3206 = vcombine.low %v3112, %v3113
    %v3208 = vunpack.c.l.s4 1983009808
    %v3209 = vunpack.c.0.s8 %v3208
    %v3210 = vlaneseq
    %v3211 = vshrl.u32 %v3210, 7
    %v3212 = vsub.s32 %v3209, %v3211
    %v3213 = vrot.slane %v3206, %v3212
    %v3214 = vcombine.low %v3189, %v3197
    %v3215 = vcombine.high %v3189, %v3197
    %v3217 = vunpack.c.l.s4 1934713408
    %v3218 = vunpack.c.0.s8 %v3217
    %v3219 = vlaneseq
    %v3220 = vshrl.u32 %v3219, 7
    %v3221 = vsub.s32 %v3218, %v3220
    %v3222 = vrot.slane %v3214, %v3221
    %v3224 = vunpack.c.l.s4 1934713408
    %v3225 = vunpack.c.0.s8 %v3224
    %v3226 = vlaneseq
    %v3227 = vshrl.u32 %v3226, 7
    %v3228 = vsub.s32 %v3225, %v3227
    %v3229 = vrot.slane %v3215, %v3228
    %v3230 = vcombine.low %v3205, %v3213
    %v3231 = vcombine.high %v3205, %v3213
    %v3233 = vunpack.c.l.s4 1934713408
    %v3234 = vunpack.c.0.s8 %v3233
    %v3235 = vlaneseq
    %v3236 = vshrl.u32 %v3235, 7
    %v3237 = vsub.s32 %v3234, %v3236
    %v3238 = vrot.slane %v3230, %v3237
    %v3240 = vunpack.c.l.s4 1934713408
    %v3241 = vunpack.c.0.s8 %v3240
    %v3242 = vlaneseq
    %v3243 = vshrl.u32 %v3242, 7
    %v3244 = vsub.s32 %v3241, %v3243
    %v3245 = vrot.slane %v3231, %v3244
    %v3246 = vcombine.low %v3222, %v3238
    %v3247 = vcombine.high %v3222, %v3238
    %v3248 = vcombine.low %v3229, %v3245
    %v3249 = vcombine.high %v3229, %v3245
    %3252 = vrot.lane.b32.xlu0 %v3179, 8
    %v3253 = vpop.permute.xlu0 %3252
    %3254 = vrot.lane.b32.xlu0 %v3247, 8
    %v3255 = vpop.permute.xlu0 %3254
    %3260 = vrot.lane.b32.xlu0 %v3180, 16
    %v3261 = vpop.permute.xlu0 %3260
    %3262 = vrot.lane.b32.xlu0 %v3248, 16
    %v3263 = vpop.permute.xlu0 %3262
    %3268 = vrot.lane.b32.xlu0 %v3181, 24
    %v3269 = vpop.permute.xlu0 %3268
    %3270 = vrot.lane.b32.xlu0 %v3249, 24
    %v3271 = vpop.permute.xlu0 %3270
    %v3274 = vsel %vm2496, %v3178, %v3253
    %v3275 = vsel %vm2496, %v3246, %v3255
    %vm3276 = vcmask 130048
    %v3277 = vsel %vm3276, %v3274, %v3261
    %v3278 = vsel %vm3276, %v3275, %v3263
    %vm3279 = vcmask 195584
    %v3280 = vsel %vm3279, %v3277, %v3269
    %v3281 = vsel %vm3279, %v3278, %v3271
    %v3282 = vpack.c.bf16 %v3281, %v3280
    %v3283 = vld [vmem:[%s7] sm:$0xf]
    %v3284 = vld [vmem:[%s7 + $0x4] sm:$0xf]
    %v3285 = vld [vmem:[%s7 + $0x8] sm:$0xf]
    %v3286 = vld [vmem:[%s7 + $0xc] sm:$0xf]
    %v3291 = vunpack.c.l.b16 %v3283
    %v3292 = vunpack.c.l.b16 %v3284
    %v3293 = vunpack.c.l.b16 %v3285
    %v3294 = vunpack.c.l.b16 %v3286
    %v3295 = vpack.c.b16 %v3292, %v3291
    %v3296 = vpack.c.b16 %v3294, %v3293
    %v3300 = vsel %vm37, %v3282, 0
    %3302 = vmatprep.subr.bf16.mxu0 0
    %3303 = vmatpush1.bf16.msra.mxu0 %v3295
    %3304 = vmatprep.subr.bf16.mxu0 0
    %3305 = vmatpush1.bf16.msra.mxu0 %v3296
    %3306 = vmatprep.subr.bf16.mxu0 0
    %3307 = vmatpush1.bf16.msra.mxu0 0
    %3308 = vmatprep.subr.bf16.mxu0 0
    %3309 = vmatpush1.bf16.msra.mxu0 0
    %3310 = vmatprep.subr.bf16.mxu0 0
    %3311 = vmatpush1.bf16.msra.mxu0 0
    %3312 = vmatprep.subr.bf16.mxu0 0
    %3313 = vmatpush1.bf16.msra.mxu0 0
    %3314 = vmatprep.subr.bf16.mxu0 0
    %3315 = vmatpush1.bf16.msra.mxu0 0
    %3316 = vmatprep.subr.bf16.mxu0 0
    %3317 = vmatpush1.bf16.msra.mxu0 0
    %3318 = vmatprep.subr.bf16.mxu0 0
    %3319 = vmatpush1.bf16.msra.mxu0 0
    %3320 = vmatprep.subr.bf16.mxu0 0
    %3321 = vmatpush1.bf16.msra.mxu0 0
    %3322 = vmatprep.subr.bf16.mxu0 0
    %3323 = vmatpush1.bf16.msra.mxu0 0
    %3324 = vmatprep.subr.bf16.mxu0 0
    %3325 = vmatpush1.bf16.msra.mxu0 0
    %3326 = vmatprep.subr.bf16.mxu0 0
    %3327 = vmatpush1.bf16.msra.mxu0 0
    %3328 = vmatprep.subr.bf16.mxu0 0
    %3329 = vmatpush1.bf16.msra.mxu0 0
    %3330 = vmatprep.subr.bf16.mxu0 0
    %3331 = vmatpush1.bf16.msra.mxu0 0
    %3332 = vmatprep.subr.bf16.mxu0 0
    %3333 = vmatpush1.bf16.msra.mxu0 0
    %3334 = vmatprep.mubr.bf16.mxu0 0
    %3335 = vmatmul.mubr.bf16.gmra.mrb[0].mxu0 %v3300
    %v3336 = vpop.f32.mrb[0].mxu0
    %v3337 = vadd.f32 0.0, %v3336
    %v3338 = vpop.f32.mrb[0].mxu0
    %v3339 = vpop.f32.mrb[0].mxu0
    %v3340 = vadd.f32 0.0, %v3339
    %v3341 = vpop.f32.mrb[0].mxu0
    %3342 = vdwg.mxu0
    %3343 = vst.msk [vmem:[#allocation2] sm:$0xff] %vm37, %v3337
    %3344 = vst.msk [vmem:[#allocation2 + $0x8] sm:$0xff] %vm37, %v3340
    // Predicated region
    $region34: #{tpu_custom_call.1} parent=1 // pred_check
      _
    $region35: #{tpu_custom_call.1} parent=1 // pred_check_branch
      %3346 = sbr.rel (0) target = $region37
    $region36: #{tpu_custom_call.1} parent=1 // pred_region
      %s3348 = ssub.s32 256, 256
      %3349 = vsyncadd [#allocation3], %s3348
      %s3350 = sshll.u32 [#allocation2], 4
      %s3351 = int_to_ptr.vmem [resolvable:$true] %s3350
      %3356 = dma.vmem_to_hbm [thread:$0]  %s3351, 256, %s8, [#allocation3], 128, 128, 8
    $region37: #{tpu_custom_call.1} parent=1 // pred_fallthru
      _
    // Predicated region
    $region38: #{tpu_custom_call.1} parent=1 // pred_check
      _
    $region39: #{tpu_custom_call.1} parent=1 // pred_check_branch
      %3358 = sbr.rel (0) target = $region41
    $region40: #{tpu_custom_call.1} parent=1 // pred_region
      %3359 = dma.done [#allocation3], 256
    $region41: #{tpu_custom_call.1} parent=1 // pred_fallthru
      _
    %3360 = vsyncpa [#allocation3], 1

</llo_original>
